<compile_context>
chip_gen: v6e
topology: v6e:2x2x1
jax: 0.10.0
libtpu: 0.0.40
codegen_flags: <defaults>
</compile_context>

<pallas_src>
import functools

import jax
import jax.numpy as jnp
from jax import lax
from jax.experimental import pallas as pl
from jax.experimental.pallas import tpu as pltpu


def _attn_block_kernel(x_ref, wqkv_ref, wout_ref, bout_ref, o_ref,
                       *, heads, dim_head, mu):
    # x_ref:    (B, N, D)
    # wqkv_ref: (D, 3*H*Dh)   -- q columns already multiplied by dim_head**-0.5
    # wout_ref: (H*Dh, D)
    # bout_ref: (1, D)
    # o_ref:    (B, N, D)
    B, N, D = x_ref.shape
    inner = heads * dim_head

    x = x_ref[...]                                             # (B, N, D)
    bias = bout_ref[...]                                       # (1, D), broadcasts over rows

    # One QKV projection for all B*N rows (scale pre-folded into the weights on the host).
    qkv = jnp.dot(x.reshape(B * N, D), wqkv_ref[...],
                  preferred_element_type=jnp.float32)          # (B*N, 3*inner)

    # Contract the last dim of both operands: q @ k^T without an explicit transpose of k.
    contract_last = (((1,), (1,)), ((), ()))

    for b in range(B):                                         # B, heads: small & static
        r0 = b * N
        # Accumulator starts with residual + output bias; per-head projected attention
        # outputs are accumulated on top (no head concatenate, single live (N,D) value).
        acc = mu * x[b].astype(jnp.float32) + bias             # (N, D)
        for h in range(heads):
            c = h * dim_head
            q = qkv[r0:r0 + N, 0 * inner + c: 0 * inner + c + dim_head]   # (N, Dh), pre-scaled
            k = qkv[r0:r0 + N, 1 * inner + c: 1 * inner + c + dim_head]
            v = qkv[r0:r0 + N, 2 * inner + c: 2 * inner + c + dim_head]

            dots = lax.dot_general(q, k, contract_last,
                                   preferred_element_type=jnp.float32)    # (N, N)

            # Numerically stable softmax with deferred normalization.
            m = jnp.max(dots, axis=-1, keepdims=True)
            e = jnp.exp(dots - m)                              # unnormalized probabilities
            s = jnp.sum(e, axis=-1, keepdims=True)             # (N, 1) row sums

            pv = jnp.dot(e, v, preferred_element_type=jnp.float32)        # (N, Dh)
            pv = pv * pl.reciprocal(s, approx=True)            # EUP slot, essentially free

            # Head merge + output projection fused: accumulate through the head's
            # (sublane-aligned) row block of W_out.
            acc = acc + jnp.dot(pv, wout_ref[c: c + dim_head, :],
                                preferred_element_type=jnp.float32)       # (N, D)

        o_ref[b] = acc.astype(o_ref.dtype)


def no_ln_attn_block(x, w_qkv, w_out, b_out, *, heads, dim_head, mu):
    """x: (B, N, D).  w_qkv: (D, 3*heads*dim_head).  w_out: (heads*dim_head, D).  b_out: (1, D)."""
    B, N, D = x.shape
    inner = heads * dim_head
    scale = float(dim_head) ** -0.5

    # Fold the attention scale into the q-columns of the QKV weight (one-time, host side).
    w_qkv_scaled = w_qkv.at[:, :inner].multiply(scale)

    kernel = functools.partial(_attn_block_kernel,
                               heads=heads, dim_head=dim_head, mu=mu)

    # Tiny config -> single grid step over the whole problem; full-array blocks.
    # TODO(synk): for production ViT sizes (N >= 256, D >= 512) add query/KV tiling with an
    # online-softmax accumulator, bf16 MXU inputs (v6e/v7x), "parallel" batch/query axes,
    # and explicit pltpu.CompilerParams(vmem_limit_bytes=...) re-derived for v7x's 64 MiB VMEM.
    return pl.pallas_call(
        kernel,
        out_shape=jax.ShapeDtypeStruct((B, N, D), x.dtype),
        grid=(1,),
        in_specs=[
            pl.BlockSpec((B, N, D), lambda i: (0, 0, 0)),
            pl.BlockSpec((D, 3 * inner), lambda i: (0, 0)),
            pl.BlockSpec((inner, D), lambda i: (0, 0)),
            pl.BlockSpec((1, D), lambda i: (0, 0)),
        ],
        out_specs=pl.BlockSpec((B, N, D), lambda i: (0, 0, 0)),
        compiler_params=pltpu.CompilerParams(
            dimension_semantics=("arbitrary",)),
    )(x, w_qkv_scaled, w_out, b_out)


def reference_jax(x, w_qkv, w_out, b_out, *, heads, dim_head, mu):
    B, N, D = x.shape
    inner = heads * dim_head
    scale = float(dim_head) ** -0.5
    qkv = x @ w_qkv                                            # (B, N, 3*inner)
    q, k, v = jnp.split(qkv, 3, axis=-1)

    def to_heads(t):
        return t.reshape(B, N, heads, dim_head).transpose(0, 2, 1, 3)  # (B,H,N,Dh)

    q, k, v = map(to_heads, (q, k, v))
    dots = jnp.einsum('bhnd,bhmd->bhnm', q, k) * scale
    attn = jax.nn.softmax(dots, axis=-1)
    out = jnp.einsum('bhnm,bhmd->bhnd', attn, v)
    out = out.transpose(0, 2, 1, 3).reshape(B, N, inner)
    out = out @ w_out + b_out
    return out + mu * x


if __name__ == "__main__":
    # Small config consistent with the module.
    B, N = 2, 8          # batch, sequence length
    dim = 32             # config.dim
    heads = 4            # config.heads
    dim_head = 8         # config.dim_head
    mu = 0.5             # config.mu
    inner = heads * dim_head  # 32 (project_out=True since heads != 1)

    key = jax.random.PRNGKey(0)
    kx, kqkv, kout, kb = jax.random.split(key, 4)
    x = jax.random.normal(kx, (B, N, dim), dtype=jnp.float32)
    # Deterministic synthetic parameters (Linear weights, pre-transposed for x @ W).
    w_qkv = jax.random.normal(kqkv, (dim, 3 * inner), dtype=jnp.float32) * 0.05
    w_out = jax.random.normal(kout, (inner, dim), dtype=jnp.float32) * 0.05
    b_out = (jax.random.normal(kb, (1, dim), dtype=jnp.float32) * 0.05)
    # TODO(synk): Dropout(config.dropout) is identity at inference; train-mode dropout not implemented.

    y = no_ln_attn_block(x, w_qkv, w_out, b_out,
                         heads=heads, dim_head=dim_head, mu=mu)
    jax.block_until_ready(y)

    y_ref = reference_jax(x, w_qkv, w_out, b_out,
                          heads=heads, dim_head=dim_head, mu=mu)
    # Tolerance loosened slightly vs. 1e-4: softmax denominator uses the EUP
    # approximate reciprocal (pl.reciprocal(approx=True)).
    assert jnp.allclose(y, y_ref, atol=1e-3, rtol=1e-3), "mismatch vs reference"

    print("KERNEL_OK")
</pallas_src>

<mosaic_0001>
module attributes {stable_mosaic.version = 11 : i64} {
  func.func @_attn_block_kernel(%arg0: i32, %arg1: memref<2x8x32xf32, #tpu.memory_space<vmem>>, %arg2: memref<32x96xf32, #tpu.memory_space<vmem>>, %arg3: memref<32x32xf32, #tpu.memory_space<vmem>>, %arg4: memref<1x32xf32, #tpu.memory_space<vmem>>, %arg5: memref<2x8x32xf32, #tpu.memory_space<vmem>>) attributes {dimension_semantics = [#tpu.dimension_semantics<arbitrary>], iteration_bounds = array<i64: 1>, scalar_prefetch = 0 : i64, scratch_operands = 0 : i64, tpu.core_type = #tpu.core_type<tc>, window_params = [{pipeline_mode = #tpu.pipeline_mode<synchronous>, transform_indices = @transform_0, window_bounds = array<i64: 2, 8, 32>}, {pipeline_mode = #tpu.pipeline_mode<synchronous>, transform_indices = @transform_1, window_bounds = array<i64: 32, 96>}, {pipeline_mode = #tpu.pipeline_mode<synchronous>, transform_indices = @transform_2, window_bounds = array<i64: 32, 32>}, {pipeline_mode = #tpu.pipeline_mode<synchronous>, transform_indices = @transform_3, window_bounds = array<i64: 1, 32>}, {pipeline_mode = #tpu.pipeline_mode<synchronous>, transform_indices = @transform_4, window_bounds = array<i64: 2, 8, 32>}]} {
    %c0 = arith.constant 0 : index
    %c0_0 = arith.constant 0 : index
    %c0_1 = arith.constant 0 : index
    %0 = vector.load %arg1[%c0, %c0_0, %c0_1] : memref<2x8x32xf32, #tpu.memory_space<vmem>>, vector<2x8x32xf32>
    %c0_2 = arith.constant 0 : index
    %c0_3 = arith.constant 0 : index
    %1 = vector.load %arg4[%c0_2, %c0_3] : memref<1x32xf32, #tpu.memory_space<vmem>>, vector<1x32xf32>
    %2 = vector.shape_cast %0 : vector<2x8x32xf32> to vector<16x32xf32>
    %c0_4 = arith.constant 0 : index
    %c0_5 = arith.constant 0 : index
    %3 = vector.load %arg2[%c0_4, %c0_5] : memref<32x96xf32, #tpu.memory_space<vmem>>, vector<32x96xf32>
    %cst = arith.constant dense<0.000000e+00> : vector<16x96xf32>
    %4 = tpu.matmul %2, %3, %cst {dimension_numbers = #tpu.dot_dimension_numbers<[1], [0], [0], [1], [0, 0, 1, 1], [], []>} : vector<16x32xf32>, vector<32x96xf32>, vector<16x96xf32> -> vector<16x96xf32>
    %5 = vector.extract_strided_slice %0 {offsets = [0, 0, 0], sizes = [1, 8, 32], strides = [1, 1, 1]} : vector<2x8x32xf32> to vector<1x8x32xf32>
    %6 = vector.shape_cast %5 : vector<1x8x32xf32> to vector<8x32xf32>
    %cst_6 = arith.constant 5.000000e-01 : f32
    %7 = vector.broadcast %cst_6 : f32 to vector<8x32xf32>
    %8 = arith.mulf %7, %6 : vector<8x32xf32>
    %9 = vector.broadcast %1 : vector<1x32xf32> to vector<8x32xf32>
    %10 = arith.addf %8, %9 : vector<8x32xf32>
    %11 = vector.extract_strided_slice %4 {offsets = [0, 0], sizes = [8, 8], strides = [1, 1]} : vector<16x96xf32> to vector<8x8xf32>
    %12 = vector.extract_strided_slice %4 {offsets = [0, 32], sizes = [8, 8], strides = [1, 1]} : vector<16x96xf32> to vector<8x8xf32>
    %13 = vector.extract_strided_slice %4 {offsets = [0, 64], sizes = [8, 8], strides = [1, 1]} : vector<16x96xf32> to vector<8x8xf32>
    %cst_7 = arith.constant dense<0.000000e+00> : vector<8x8xf32>
    %14 = tpu.matmul %11, %12, %cst_7 {dimension_numbers = #tpu.dot_dimension_numbers<[1], [1], [0], [0], [0, 0, 1, 0], [], []>} : vector<8x8xf32>, vector<8x8xf32>, vector<8x8xf32> -> vector<8x8xf32>
    %cst_8 = arith.constant dense<0xFF800000> : vector<8xf32>
    %15 = vector.multi_reduction <maximumf>, %14, %cst_8 [1] : vector<8x8xf32> to vector<8xf32>
    %16 = vector.shape_cast %15 : vector<8xf32> to vector<8x1xf32>
    %17 = vector.broadcast %16 : vector<8x1xf32> to vector<8x8xf32>
    %18 = arith.subf %14, %17 : vector<8x8xf32>
    %19 = math.exp %18 : vector<8x8xf32>
    %cst_9 = arith.constant dense<0.000000e+00> : vector<8xf32>
    %20 = vector.multi_reduction <add>, %19, %cst_9 [1] : vector<8x8xf32> to vector<8xf32>
    %21 = vector.shape_cast %20 : vector<8xf32> to vector<8x1xf32>
    %cst_10 = arith.constant dense<0.000000e+00> : vector<8x8xf32>
    %22 = tpu.matmul %19, %13, %cst_10 {dimension_numbers = #tpu.dot_dimension_numbers<[1], [0], [0], [1], [0, 0, 1, 1], [], []>} : vector<8x8xf32>, vector<8x8xf32>, vector<8x8xf32> -> vector<8x8xf32>
    %23 = tpu.reciprocal %21 {approx = true} : vector<8x1xf32> -> vector<8x1xf32>
    %24 = vector.broadcast %23 : vector<8x1xf32> to vector<8x8xf32>
    %25 = arith.mulf %22, %24 : vector<8x8xf32>
    %c0_11 = arith.constant 0 : index
    %c0_12 = arith.constant 0 : index
    %26 = vector.load %arg3[%c0_11, %c0_12] : memref<32x32xf32, #tpu.memory_space<vmem>>, vector<8x32xf32>
    %cst_13 = arith.constant dense<0.000000e+00> : vector<8x32xf32>
    %27 = tpu.matmul %25, %26, %cst_13 {dimension_numbers = #tpu.dot_dimension_numbers<[1], [0], [0], [1], [0, 0, 1, 1], [], []>} : vector<8x8xf32>, vector<8x32xf32>, vector<8x32xf32> -> vector<8x32xf32>
    %28 = arith.addf %10, %27 : vector<8x32xf32>
    %29 = vector.extract_strided_slice %4 {offsets = [0, 8], sizes = [8, 8], strides = [1, 1]} : vector<16x96xf32> to vector<8x8xf32>
    %30 = vector.extract_strided_slice %4 {offsets = [0, 40], sizes = [8, 8], strides = [1, 1]} : vector<16x96xf32> to vector<8x8xf32>
    %31 = vector.extract_strided_slice %4 {offsets = [0, 72], sizes = [8, 8], strides = [1, 1]} : vector<16x96xf32> to vector<8x8xf32>
    %cst_14 = arith.constant dense<0.000000e+00> : vector<8x8xf32>
    %32 = tpu.matmul %29, %30, %cst_14 {dimension_numbers = #tpu.dot_dimension_numbers<[1], [1], [0], [0], [0, 0, 1, 0], [], []>} : vector<8x8xf32>, vector<8x8xf32>, vector<8x8xf32> -> vector<8x8xf32>
    %cst_15 = arith.constant dense<0xFF800000> : vector<8xf32>
    %33 = vector.multi_reduction <maximumf>, %32, %cst_15 [1] : vector<8x8xf32> to vector<8xf32>
    %34 = vector.shape_cast %33 : vector<8xf32> to vector<8x1xf32>
    %35 = vector.broadcast %34 : vector<8x1xf32> to vector<8x8xf32>
    %36 = arith.subf %32, %35 : vector<8x8xf32>
    %37 = math.exp %36 : vector<8x8xf32>
    %cst_16 = arith.constant dense<0.000000e+00> : vector<8xf32>
    %38 = vector.multi_reduction <add>, %37, %cst_16 [1] : vector<8x8xf32> to vector<8xf32>
    %39 = vector.shape_cast %38 : vector<8xf32> to vector<8x1xf32>
    %cst_17 = arith.constant dense<0.000000e+00> : vector<8x8xf32>
    %40 = tpu.matmul %37, %31, %cst_17 {dimension_numbers = #tpu.dot_dimension_numbers<[1], [0], [0], [1], [0, 0, 1, 1], [], []>} : vector<8x8xf32>, vector<8x8xf32>, vector<8x8xf32> -> vector<8x8xf32>
    %41 = tpu.reciprocal %39 {approx = true} : vector<8x1xf32> -> vector<8x1xf32>
    %42 = vector.broadcast %41 : vector<8x1xf32> to vector<8x8xf32>
    %43 = arith.mulf %40, %42 : vector<8x8xf32>
    %c8 = arith.constant 8 : index
    %c0_18 = arith.constant 0 : index
    %44 = vector.load %arg3[%c8, %c0_18] : memref<32x32xf32, #tpu.memory_space<vmem>>, vector<8x32xf32>
    %cst_19 = arith.constant dense<0.000000e+00> : vector<8x32xf32>
    %45 = tpu.matmul %43, %44, %cst_19 {dimension_numbers = #tpu.dot_dimension_numbers<[1], [0], [0], [1], [0, 0, 1, 1], [], []>} : vector<8x8xf32>, vector<8x32xf32>, vector<8x32xf32> -> vector<8x32xf32>
    %46 = arith.addf %28, %45 : vector<8x32xf32>
    %47 = vector.extract_strided_slice %4 {offsets = [0, 16], sizes = [8, 8], strides = [1, 1]} : vector<16x96xf32> to vector<8x8xf32>
    %48 = vector.extract_strided_slice %4 {offsets = [0, 48], sizes = [8, 8], strides = [1, 1]} : vector<16x96xf32> to vector<8x8xf32>
    %49 = vector.extract_strided_slice %4 {offsets = [0, 80], sizes = [8, 8], strides = [1, 1]} : vector<16x96xf32> to vector<8x8xf32>
    %cst_20 = arith.constant dense<0.000000e+00> : vector<8x8xf32>
    %50 = tpu.matmul %47, %48, %cst_20 {dimension_numbers = #tpu.dot_dimension_numbers<[1], [1], [0], [0], [0, 0, 1, 0], [], []>} : vector<8x8xf32>, vector<8x8xf32>, vector<8x8xf32> -> vector<8x8xf32>
    %cst_21 = arith.constant dense<0xFF800000> : vector<8xf32>
    %51 = vector.multi_reduction <maximumf>, %50, %cst_21 [1] : vector<8x8xf32> to vector<8xf32>
    %52 = vector.shape_cast %51 : vector<8xf32> to vector<8x1xf32>
    %53 = vector.broadcast %52 : vector<8x1xf32> to vector<8x8xf32>
    %54 = arith.subf %50, %53 : vector<8x8xf32>
    %55 = math.exp %54 : vector<8x8xf32>
    %cst_22 = arith.constant dense<0.000000e+00> : vector<8xf32>
    %56 = vector.multi_reduction <add>, %55, %cst_22 [1] : vector<8x8xf32> to vector<8xf32>
    %57 = vector.shape_cast %56 : vector<8xf32> to vector<8x1xf32>
    %cst_23 = arith.constant dense<0.000000e+00> : vector<8x8xf32>
    %58 = tpu.matmul %55, %49, %cst_23 {dimension_numbers = #tpu.dot_dimension_numbers<[1], [0], [0], [1], [0, 0, 1, 1], [], []>} : vector<8x8xf32>, vector<8x8xf32>, vector<8x8xf32> -> vector<8x8xf32>
    %59 = tpu.reciprocal %57 {approx = true} : vector<8x1xf32> -> vector<8x1xf32>
    %60 = vector.broadcast %59 : vector<8x1xf32> to vector<8x8xf32>
    %61 = arith.mulf %58, %60 : vector<8x8xf32>
    %c16 = arith.constant 16 : index
    %c0_24 = arith.constant 0 : index
    %62 = vector.load %arg3[%c16, %c0_24] : memref<32x32xf32, #tpu.memory_space<vmem>>, vector<8x32xf32>
    %cst_25 = arith.constant dense<0.000000e+00> : vector<8x32xf32>
    %63 = tpu.matmul %61, %62, %cst_25 {dimension_numbers = #tpu.dot_dimension_numbers<[1], [0], [0], [1], [0, 0, 1, 1], [], []>} : vector<8x8xf32>, vector<8x32xf32>, vector<8x32xf32> -> vector<8x32xf32>
    %64 = arith.addf %46, %63 : vector<8x32xf32>
    %65 = vector.extract_strided_slice %4 {offsets = [0, 24], sizes = [8, 8], strides = [1, 1]} : vector<16x96xf32> to vector<8x8xf32>
    %66 = vector.extract_strided_slice %4 {offsets = [0, 56], sizes = [8, 8], strides = [1, 1]} : vector<16x96xf32> to vector<8x8xf32>
    %67 = vector.extract_strided_slice %4 {offsets = [0, 88], sizes = [8, 8], strides = [1, 1]} : vector<16x96xf32> to vector<8x8xf32>
    %cst_26 = arith.constant dense<0.000000e+00> : vector<8x8xf32>
    %68 = tpu.matmul %65, %66, %cst_26 {dimension_numbers = #tpu.dot_dimension_numbers<[1], [1], [0], [0], [0, 0, 1, 0], [], []>} : vector<8x8xf32>, vector<8x8xf32>, vector<8x8xf32> -> vector<8x8xf32>
    %cst_27 = arith.constant dense<0xFF800000> : vector<8xf32>
    %69 = vector.multi_reduction <maximumf>, %68, %cst_27 [1] : vector<8x8xf32> to vector<8xf32>
    %70 = vector.shape_cast %69 : vector<8xf32> to vector<8x1xf32>
    %71 = vector.broadcast %70 : vector<8x1xf32> to vector<8x8xf32>
    %72 = arith.subf %68, %71 : vector<8x8xf32>
    %73 = math.exp %72 : vector<8x8xf32>
    %cst_28 = arith.constant dense<0.000000e+00> : vector<8xf32>
    %74 = vector.multi_reduction <add>, %73, %cst_28 [1] : vector<8x8xf32> to vector<8xf32>
    %75 = vector.shape_cast %74 : vector<8xf32> to vector<8x1xf32>
    %cst_29 = arith.constant dense<0.000000e+00> : vector<8x8xf32>
    %76 = tpu.matmul %73, %67, %cst_29 {dimension_numbers = #tpu.dot_dimension_numbers<[1], [0], [0], [1], [0, 0, 1, 1], [], []>} : vector<8x8xf32>, vector<8x8xf32>, vector<8x8xf32> -> vector<8x8xf32>
    %77 = tpu.reciprocal %75 {approx = true} : vector<8x1xf32> -> vector<8x1xf32>
    %78 = vector.broadcast %77 : vector<8x1xf32> to vector<8x8xf32>
    %79 = arith.mulf %76, %78 : vector<8x8xf32>
    %c24 = arith.constant 24 : index
    %c0_30 = arith.constant 0 : index
    %80 = vector.load %arg3[%c24, %c0_30] : memref<32x32xf32, #tpu.memory_space<vmem>>, vector<8x32xf32>
    %cst_31 = arith.constant dense<0.000000e+00> : vector<8x32xf32>
    %81 = tpu.matmul %79, %80, %cst_31 {dimension_numbers = #tpu.dot_dimension_numbers<[1], [0], [0], [1], [0, 0, 1, 1], [], []>} : vector<8x8xf32>, vector<8x32xf32>, vector<8x32xf32> -> vector<8x32xf32>
    %82 = arith.addf %64, %81 : vector<8x32xf32>
    %c0_32 = arith.constant 0 : index
    %c0_33 = arith.constant 0 : index
    %c0_34 = arith.constant 0 : index
    %83 = vector.load %arg5[%c0_32, %c0_33, %c0_34] : memref<2x8x32xf32, #tpu.memory_space<vmem>>, vector<1x8x32xf32>
    %84 = vector.shape_cast %83 : vector<1x8x32xf32> to vector<8x32xf32>
    %85 = vector.shape_cast %82 : vector<8x32xf32> to vector<1x8x32xf32>
    tpu.vector_store %arg5[%c0_32, %c0_33, %c0_34], %85 {strides = array<i32>} : memref<2x8x32xf32, #tpu.memory_space<vmem>>, vector<1x8x32xf32>,
    %86 = vector.extract_strided_slice %0 {offsets = [1, 0, 0], sizes = [1, 8, 32], strides = [1, 1, 1]} : vector<2x8x32xf32> to vector<1x8x32xf32>
    %87 = vector.shape_cast %86 : vector<1x8x32xf32> to vector<8x32xf32>
    %cst_35 = arith.constant 5.000000e-01 : f32
    %88 = vector.broadcast %cst_35 : f32 to vector<8x32xf32>
    %89 = arith.mulf %88, %87 : vector<8x32xf32>
    %90 = vector.broadcast %1 : vector<1x32xf32> to vector<8x32xf32>
    %91 = arith.addf %89, %90 : vector<8x32xf32>
    %92 = vector.extract_strided_slice %4 {offsets = [8, 0], sizes = [8, 8], strides = [1, 1]} : vector<16x96xf32> to vector<8x8xf32>
    %93 = vector.extract_strided_slice %4 {offsets = [8, 32], sizes = [8, 8], strides = [1, 1]} : vector<16x96xf32> to vector<8x8xf32>
    %94 = vector.extract_strided_slice %4 {offsets = [8, 64], sizes = [8, 8], strides = [1, 1]} : vector<16x96xf32> to vector<8x8xf32>
    %cst_36 = arith.constant dense<0.000000e+00> : vector<8x8xf32>
    %95 = tpu.matmul %92, %93, %cst_36 {dimension_numbers = #tpu.dot_dimension_numbers<[1], [1], [0], [0], [0, 0, 1, 0], [], []>} : vector<8x8xf32>, vector<8x8xf32>, vector<8x8xf32> -> vector<8x8xf32>
    %cst_37 = arith.constant dense<0xFF800000> : vector<8xf32>
    %96 = vector.multi_reduction <maximumf>, %95, %cst_37 [1] : vector<8x8xf32> to vector<8xf32>
    %97 = vector.shape_cast %96 : vector<8xf32> to vector<8x1xf32>
    %98 = vector.broadcast %97 : vector<8x1xf32> to vector<8x8xf32>
    %99 = arith.subf %95, %98 : vector<8x8xf32>
    %100 = math.exp %99 : vector<8x8xf32>
    %cst_38 = arith.constant dense<0.000000e+00> : vector<8xf32>
    %101 = vector.multi_reduction <add>, %100, %cst_38 [1] : vector<8x8xf32> to vector<8xf32>
    %102 = vector.shape_cast %101 : vector<8xf32> to vector<8x1xf32>
    %cst_39 = arith.constant dense<0.000000e+00> : vector<8x8xf32>
    %103 = tpu.matmul %100, %94, %cst_39 {dimension_numbers = #tpu.dot_dimension_numbers<[1], [0], [0], [1], [0, 0, 1, 1], [], []>} : vector<8x8xf32>, vector<8x8xf32>, vector<8x8xf32> -> vector<8x8xf32>
    %104 = tpu.reciprocal %102 {approx = true} : vector<8x1xf32> -> vector<8x1xf32>
    %105 = vector.broadcast %104 : vector<8x1xf32> to vector<8x8xf32>
    %106 = arith.mulf %103, %105 : vector<8x8xf32>
    %c0_40 = arith.constant 0 : index
    %c0_41 = arith.constant 0 : index
    %107 = vector.load %arg3[%c0_40, %c0_41] : memref<32x32xf32, #tpu.memory_space<vmem>>, vector<8x32xf32>
    %cst_42 = arith.constant dense<0.000000e+00> : vector<8x32xf32>
    %108 = tpu.matmul %106, %107, %cst_42 {dimension_numbers = #tpu.dot_dimension_numbers<[1], [0], [0], [1], [0, 0, 1, 1], [], []>} : vector<8x8xf32>, vector<8x32xf32>, vector<8x32xf32> -> vector<8x32xf32>
    %109 = arith.addf %91, %108 : vector<8x32xf32>
    %110 = vector.extract_strided_slice %4 {offsets = [8, 8], sizes = [8, 8], strides = [1, 1]} : vector<16x96xf32> to vector<8x8xf32>
    %111 = vector.extract_strided_slice %4 {offsets = [8, 40], sizes = [8, 8], strides = [1, 1]} : vector<16x96xf32> to vector<8x8xf32>
    %112 = vector.extract_strided_slice %4 {offsets = [8, 72], sizes = [8, 8], strides = [1, 1]} : vector<16x96xf32> to vector<8x8xf32>
    %cst_43 = arith.constant dense<0.000000e+00> : vector<8x8xf32>
    %113 = tpu.matmul %110, %111, %cst_43 {dimension_numbers = #tpu.dot_dimension_numbers<[1], [1], [0], [0], [0, 0, 1, 0], [], []>} : vector<8x8xf32>, vector<8x8xf32>, vector<8x8xf32> -> vector<8x8xf32>
    %cst_44 = arith.constant dense<0xFF800000> : vector<8xf32>
    %114 = vector.multi_reduction <maximumf>, %113, %cst_44 [1] : vector<8x8xf32> to vector<8xf32>
    %115 = vector.shape_cast %114 : vector<8xf32> to vector<8x1xf32>
    %116 = vector.broadcast %115 : vector<8x1xf32> to vector<8x8xf32>
    %117 = arith.subf %113, %116 : vector<8x8xf32>
    %118 = math.exp %117 : vector<8x8xf32>
    %cst_45 = arith.constant dense<0.000000e+00> : vector<8xf32>
    %119 = vector.multi_reduction <add>, %118, %cst_45 [1] : vector<8x8xf32> to vector<8xf32>
    %120 = vector.shape_cast %119 : vector<8xf32> to vector<8x1xf32>
    %cst_46 = arith.constant dense<0.000000e+00> : vector<8x8xf32>
    %121 = tpu.matmul %118, %112, %cst_46 {dimension_numbers = #tpu.dot_dimension_numbers<[1], [0], [0], [1], [0, 0, 1, 1], [], []>} : vector<8x8xf32>, vector<8x8xf32>, vector<8x8xf32> -> vector<8x8xf32>
    %122 = tpu.reciprocal %120 {approx = true} : vector<8x1xf32> -> vector<8x1xf32>
    %123 = vector.broadcast %122 : vector<8x1xf32> to vector<8x8xf32>
    %124 = arith.mulf %121, %123 : vector<8x8xf32>
    %c8_47 = arith.constant 8 : index
    %c0_48 = arith.constant 0 : index
    %125 = vector.load %arg3[%c8_47, %c0_48] : memref<32x32xf32, #tpu.memory_space<vmem>>, vector<8x32xf32>
    %cst_49 = arith.constant dense<0.000000e+00> : vector<8x32xf32>
    %126 = tpu.matmul %124, %125, %cst_49 {dimension_numbers = #tpu.dot_dimension_numbers<[1], [0], [0], [1], [0, 0, 1, 1], [], []>} : vector<8x8xf32>, vector<8x32xf32>, vector<8x32xf32> -> vector<8x32xf32>
    %127 = arith.addf %109, %126 : vector<8x32xf32>
    %128 = vector.extract_strided_slice %4 {offsets = [8, 16], sizes = [8, 8], strides = [1, 1]} : vector<16x96xf32> to vector<8x8xf32>
    %129 = vector.extract_strided_slice %4 {offsets = [8, 48], sizes = [8, 8], strides = [1, 1]} : vector<16x96xf32> to vector<8x8xf32>
    %130 = vector.extract_strided_slice %4 {offsets = [8, 80], sizes = [8, 8], strides = [1, 1]} : vector<16x96xf32> to vector<8x8xf32>
    %cst_50 = arith.constant dense<0.000000e+00> : vector<8x8xf32>
    %131 = tpu.matmul %128, %129, %cst_50 {dimension_numbers = #tpu.dot_dimension_numbers<[1], [1], [0], [0], [0, 0, 1, 0], [], []>} : vector<8x8xf32>, vector<8x8xf32>, vector<8x8xf32> -> vector<8x8xf32>
    %cst_51 = arith.constant dense<0xFF800000> : vector<8xf32>
    %132 = vector.multi_reduction <maximumf>, %131, %cst_51 [1] : vector<8x8xf32> to vector<8xf32>
    %133 = vector.shape_cast %132 : vector<8xf32> to vector<8x1xf32>
    %134 = vector.broadcast %133 : vector<8x1xf32> to vector<8x8xf32>
    %135 = arith.subf %131, %134 : vector<8x8xf32>
    %136 = math.exp %135 : vector<8x8xf32>
    %cst_52 = arith.constant dense<0.000000e+00> : vector<8xf32>
    %137 = vector.multi_reduction <add>, %136, %cst_52 [1] : vector<8x8xf32> to vector<8xf32>
    %138 = vector.shape_cast %137 : vector<8xf32> to vector<8x1xf32>
    %cst_53 = arith.constant dense<0.000000e+00> : vector<8x8xf32>
    %139 = tpu.matmul %136, %130, %cst_53 {dimension_numbers = #tpu.dot_dimension_numbers<[1], [0], [0], [1], [0, 0, 1, 1], [], []>} : vector<8x8xf32>, vector<8x8xf32>, vector<8x8xf32> -> vector<8x8xf32>
    %140 = tpu.reciprocal %138 {approx = true} : vector<8x1xf32> -> vector<8x1xf32>
    %141 = vector.broadcast %140 : vector<8x1xf32> to vector<8x8xf32>
    %142 = arith.mulf %139, %141 : vector<8x8xf32>
    %c16_54 = arith.constant 16 : index
    %c0_55 = arith.constant 0 : index
    %143 = vector.load %arg3[%c16_54, %c0_55] : memref<32x32xf32, #tpu.memory_space<vmem>>, vector<8x32xf32>
    %cst_56 = arith.constant dense<0.000000e+00> : vector<8x32xf32>
    %144 = tpu.matmul %142, %143, %cst_56 {dimension_numbers = #tpu.dot_dimension_numbers<[1], [0], [0], [1], [0, 0, 1, 1], [], []>} : vector<8x8xf32>, vector<8x32xf32>, vector<8x32xf32> -> vector<8x32xf32>
    %145 = arith.addf %127, %144 : vector<8x32xf32>
    %146 = vector.extract_strided_slice %4 {offsets = [8, 24], sizes = [8, 8], strides = [1, 1]} : vector<16x96xf32> to vector<8x8xf32>
    %147 = vector.extract_strided_slice %4 {offsets = [8, 56], sizes = [8, 8], strides = [1, 1]} : vector<16x96xf32> to vector<8x8xf32>
    %148 = vector.extract_strided_slice %4 {offsets = [8, 88], sizes = [8, 8], strides = [1, 1]} : vector<16x96xf32> to vector<8x8xf32>
    %cst_57 = arith.constant dense<0.000000e+00> : vector<8x8xf32>
    %149 = tpu.matmul %146, %147, %cst_57 {dimension_numbers = #tpu.dot_dimension_numbers<[1], [1], [0], [0], [0, 0, 1, 0], [], []>} : vector<8x8xf32>, vector<8x8xf32>, vector<8x8xf32> -> vector<8x8xf32>
    %cst_58 = arith.constant dense<0xFF800000> : vector<8xf32>
    %150 = vector.multi_reduction <maximumf>, %149, %cst_58 [1] : vector<8x8xf32> to vector<8xf32>
    %151 = vector.shape_cast %150 : vector<8xf32> to vector<8x1xf32>
    %152 = vector.broadcast %151 : vector<8x1xf32> to vector<8x8xf32>
    %153 = arith.subf %149, %152 : vector<8x8xf32>
    %154 = math.exp %153 : vector<8x8xf32>
    %cst_59 = arith.constant dense<0.000000e+00> : vector<8xf32>
    %155 = vector.multi_reduction <add>, %154, %cst_59 [1] : vector<8x8xf32> to vector<8xf32>
    %156 = vector.shape_cast %155 : vector<8xf32> to vector<8x1xf32>
    %cst_60 = arith.constant dense<0.000000e+00> : vector<8x8xf32>
    %157 = tpu.matmul %154, %148, %cst_60 {dimension_numbers = #tpu.dot_dimension_numbers<[1], [0], [0], [1], [0, 0, 1, 1], [], []>} : vector<8x8xf32>, vector<8x8xf32>, vector<8x8xf32> -> vector<8x8xf32>
    %158 = tpu.reciprocal %156 {approx = true} : vector<8x1xf32> -> vector<8x1xf32>
    %159 = vector.broadcast %158 : vector<8x1xf32> to vector<8x8xf32>
    %160 = arith.mulf %157, %159 : vector<8x8xf32>
    %c24_61 = arith.constant 24 : index
    %c0_62 = arith.constant 0 : index
    %161 = vector.load %arg3[%c24_61, %c0_62] : memref<32x32xf32, #tpu.memory_space<vmem>>, vector<8x32xf32>
    %cst_63 = arith.constant dense<0.000000e+00> : vector<8x32xf32>
    %162 = tpu.matmul %160, %161, %cst_63 {dimension_numbers = #tpu.dot_dimension_numbers<[1], [0], [0], [1], [0, 0, 1, 1], [], []>} : vector<8x8xf32>, vector<8x32xf32>, vector<8x32xf32> -> vector<8x32xf32>
    %163 = arith.addf %145, %162 : vector<8x32xf32>
    %c1 = arith.constant 1 : index
    %c0_64 = arith.constant 0 : index
    %c0_65 = arith.constant 0 : index
    %164 = vector.load %arg5[%c1, %c0_64, %c0_65] : memref<2x8x32xf32, #tpu.memory_space<vmem>>, vector<1x8x32xf32>
    %165 = vector.shape_cast %164 : vector<1x8x32xf32> to vector<8x32xf32>
    %166 = vector.shape_cast %163 : vector<8x32xf32> to vector<1x8x32xf32>
    tpu.vector_store %arg5[%c1, %c0_64, %c0_65], %166 {strides = array<i32>} : memref<2x8x32xf32, #tpu.memory_space<vmem>>, vector<1x8x32xf32>,
    return
  }
  func.func @transform_0(%arg0: i32) -> (i32, i32, i32) {
    %c0_i32 = arith.constant 0 : i32
    %c0_i32_0 = arith.constant 0 : i32
    %c0_i32_1 = arith.constant 0 : i32
    %c0_i32_2 = arith.constant 0 : i32
    return %c0_i32, %c0_i32_0, %c0_i32_1 : i32, i32, i32
  }
  func.func @transform_1(%arg0: i32) -> (i32, i32) {
    %c0_i32 = arith.constant 0 : i32
    %c0_i32_0 = arith.constant 0 : i32
    %c0_i32_1 = arith.constant 0 : i32
    return %c0_i32, %c0_i32_0 : i32, i32
  }
  func.func @transform_2(%arg0: i32) -> (i32, i32) {
    %c0_i32 = arith.constant 0 : i32
    %c0_i32_0 = arith.constant 0 : i32
    %c0_i32_1 = arith.constant 0 : i32
    return %c0_i32, %c0_i32_0 : i32, i32
  }
  func.func @transform_3(%arg0: i32) -> (i32, i32) {
    %c0_i32 = arith.constant 0 : i32
    %c0_i32_0 = arith.constant 0 : i32
    %c0_i32_1 = arith.constant 0 : i32
    return %c0_i32, %c0_i32_0 : i32, i32
  }
  func.func @transform_4(%arg0: i32) -> (i32, i32, i32) {
    %c0_i32 = arith.constant 0 : i32
    %c0_i32_0 = arith.constant 0 : i32
    %c0_i32_1 = arith.constant 0 : i32
    %c0_i32_2 = arith.constant 0 : i32
    return %c0_i32, %c0_i32_0, %c0_i32_1 : i32, i32, i32
  }
}

</mosaic_0001>

<llo_original>
// kernel: tpu_custom_call.1
$region0: #{tpu_custom_call.1}
  #allocation0 [shape = 'u32[]', space=smem, size = 0x4, offset = 0x4, fixed_abs, tag = 'smem constant byte address 0x4 - core index']
  #allocation1 [shape = 'u32[144,128]{1,0:T(1,128)}', space=vmem, size = 0x12000, scoped, tag = 'internal scratch']
  %s0 = inlined_call_operand.hbm [shape: f32[2,8,32], index: 0, kind: input, shape index: {}]
  %s1 = inlined_call_operand.hbm [shape: f32[32,96], index: 1, kind: input, shape index: {}]
  %s2 = inlined_call_operand.hbm [shape: f32[32,32], index: 2, kind: input, shape index: {}]
  %s3 = inlined_call_operand.vmem [shape: f32[1,32], index: 3, kind: input, shape index: {}]
  %s4 = inlined_call_operand.hbm [shape: f32[2,8,32], index: 4, kind: output, shape index: {}]
  %s5 = sld [smem:[#allocation0]]
  $region38: #{tpu_custom_call.1} parent=0
    _
  %s7 = ssub.s32 1, %s5
  %s8 = scalar_select 0, %s7, %s5
  $region1: #{tpu_custom_call.1} parent=0
    #allocation2 [shape = 'u8[8192]{0}', space=vmem, size = 0x2000, scoped, tag = 'input window, operand 0, single buffered']
    #allocation3 [shape = 's32[1]{0}', space=sflag, size = 0x4, scoped, tag = 'scoped memory for tpu_custom_call.1']
    #allocation4 [shape = 's32[1]{0}', space=sflag, size = 0x4, scoped, tag = 'scoped memory for tpu_custom_call.1']
    #allocation5 [shape = 'u8[16384]{0}', space=vmem, size = 0x4000, scoped, tag = 'input window, operand 1, single buffered']
    #allocation6 [shape = 's32[1]{0}', space=sflag, size = 0x4, scoped, tag = 'scoped memory for tpu_custom_call.1']
    #allocation7 [shape = 'u8[16384]{0}', space=vmem, size = 0x4000, scoped, tag = 'input window, operand 2, single buffered']
    #allocation8 [shape = 'u8[8192]{0}', space=vmem, size = 0x2000, scoped, tag = 'output window, operand 0, single buffered']
    %9 = vsyncpa [#allocation3], 0
    %10 = vsyncpa [#allocation6], 0
    %11 = vsyncpa [#allocation4], 0
    // Predicated region
    $region2: #{tpu_custom_call.1} parent=1 // pred_check
      _
    $region3: #{tpu_custom_call.1} parent=1 // pred_check_branch
      %13 = sbr.rel (0) target = $region5
    $region4: #{tpu_custom_call.1} parent=1 // pred_region
      %s15 = ssub.s32 256, 256
      %16 = vsyncadd [#allocation3], %s15
      %s17 = sshll.u32 [#allocation2], 4
      %s18 = int_to_ptr.vmem [resolvable:$true] %s17
      %23 = dma.hbm_to_vmem [thread:$0]  %s0, 256, %s18, [#allocation3], 128, 128, 8
    $region5: #{tpu_custom_call.1} parent=1 // pred_fallthru
      _
    // Predicated region
    $region6: #{tpu_custom_call.1} parent=1 // pred_check
      _
    $region7: #{tpu_custom_call.1} parent=1 // pred_check_branch
      %25 = sbr.rel (0) target = $region9
    $region8: #{tpu_custom_call.1} parent=1 // pred_region
      %s27 = ssub.s32 512, 512
      %28 = vsyncadd [#allocation6], %s27
      %s29 = sshll.u32 [#allocation5], 4
      %s30 = int_to_ptr.vmem [resolvable:$true] %s29
      %35 = dma.hbm_to_vmem [thread:$0]  %s1, 512, %s30, [#allocation6], 128, 128, 8
    $region9: #{tpu_custom_call.1} parent=1 // pred_fallthru
      _
    // Predicated region
    $region10: #{tpu_custom_call.1} parent=1 // pred_check
      _
    $region11: #{tpu_custom_call.1} parent=1 // pred_check_branch
      %37 = sbr.rel (0) target = $region13
    $region12: #{tpu_custom_call.1} parent=1 // pred_region
      %s39 = ssub.s32 512, 512
      %40 = vsyncadd [#allocation6], %s39
      %s41 = sshll.u32 [#allocation7], 4
      %s42 = int_to_ptr.vmem [resolvable:$true] %s41
      %47 = dma.hbm_to_vmem [thread:$0]  %s2, 512, %s42, [#allocation6], 128, 128, 8
    $region13: #{tpu_custom_call.1} parent=1 // pred_fallthru
      _
    // Predicated region
    $region14: #{tpu_custom_call.1} parent=1 // pred_check
      _
    $region15: #{tpu_custom_call.1} parent=1 // pred_check_branch
      %49 = sbr.rel (0) target = $region17
    $region16: #{tpu_custom_call.1} parent=1 // pred_region
      _
    $region17: #{tpu_custom_call.1} parent=1 // pred_fallthru
      _
    // Predicated region
    $region18: #{tpu_custom_call.1} parent=1 // pred_check
      _
    $region19: #{tpu_custom_call.1} parent=1 // pred_check_branch
      %51 = sbr.rel (0) target = $region21
    $region20: #{tpu_custom_call.1} parent=1 // pred_region
      %52 = dma.done [#allocation3], 256
    $region21: #{tpu_custom_call.1} parent=1 // pred_fallthru
      _
    // Predicated region
    $region22: #{tpu_custom_call.1} parent=1 // pred_check
      _
    $region23: #{tpu_custom_call.1} parent=1 // pred_check_branch
      %54 = sbr.rel (0) target = $region25
    $region24: #{tpu_custom_call.1} parent=1 // pred_region
      %55 = dma.done [#allocation6], 512
    $region25: #{tpu_custom_call.1} parent=1 // pred_fallthru
      _
    // Predicated region
    $region26: #{tpu_custom_call.1} parent=1 // pred_check
      _
    $region27: #{tpu_custom_call.1} parent=1 // pred_check_branch
      %57 = sbr.rel (0) target = $region29
    $region28: #{tpu_custom_call.1} parent=1 // pred_region
      %58 = dma.done [#allocation6], 512
    $region29: #{tpu_custom_call.1} parent=1 // pred_fallthru
      _
    %v59 = vld [vmem:[#allocation2] sm:$0xff]
    %v60 = vld [vmem:[#allocation2 + $0x8] sm:$0xff]
    %v61 = vld [vmem:[%s3] sm:$0x1]
    %v62 = vld [vmem:[#allocation5] sm:$0xff]
    %v63 = vld [vmem:[#allocation5 + $0x8] sm:$0xff]
    %v64 = vld [vmem:[#allocation5 + $0x10] sm:$0xff]
    %v65 = vld [vmem:[#allocation5 + $0x18] sm:$0xff]
    %vm66 = vcmask 261120
    %v68 = vsel %vm66, %v59, 0
    %v71 = vsel %vm66, %v60, 0
    %73 = vmatprep.subr.mxu0 0.0
    %74 = vmatpush1.msra.mxu0 0.0
    %75 = vmatprep.subr.mxu0 0.0
    %76 = vmatpush1.msra.mxu0 0.0
    %77 = vmatprep.subr.mxu0 0.0
    %78 = vmatpush1.msra.mxu0 0.0
    %79 = vmatprep.subr.mxu0 0.0
    %80 = vmatpush1.msra.mxu0 0.0
    %81 = vmatprep.subr.mxu0 0.0
    %82 = vmatpush1.msra.mxu0 0.0
    %83 = vmatprep.subr.mxu0 0.0
    %84 = vmatpush1.msra.mxu0 0.0
    %85 = vmatprep.subr.mxu0 0.0
    %86 = vmatpush1.msra.mxu0 0.0
    %87 = vmatprep.subr.mxu0 0.0
    %88 = vmatpush1.msra.mxu0 0.0
    %89 = vmatprep.subr.mxu0 0.0
    %90 = vmatpush1.msra.mxu0 0.0
    %91 = vmatprep.subr.mxu0 0.0
    %92 = vmatpush1.msra.mxu0 0.0
    %93 = vmatprep.subr.mxu0 0.0
    %94 = vmatpush1.msra.mxu0 0.0
    %95 = vmatprep.subr.mxu0 0.0
    %96 = vmatpush1.msra.mxu0 0.0
    %97 = vmatprep.subr.mxu0 0.0
    %98 = vmatpush1.msra.mxu0 %v65
    %99 = vmatprep.subr.mxu0 0.0
    %100 = vmatpush1.msra.mxu0 %v64
    %101 = vmatprep.subr.mxu0 0.0
    %102 = vmatpush1.msra.mxu0 %v63
    %103 = vmatprep.subr.mxu0 0.0
    %104 = vmatpush1.msra.mxu0 %v62
    %105 = vmatprep.subr.mxu0 0.0
    %106 = vmatpush2.msra.mxu0 0.0
    %107 = vmatprep.subr.mxu0 0.0
    %108 = vmatpush2.msra.mxu0 0.0
    %109 = vmatprep.subr.mxu0 0.0
    %110 = vmatpush2.msra.mxu0 0.0
    %111 = vmatprep.subr.mxu0 0.0
    %112 = vmatpush2.msra.mxu0 0.0
    %113 = vmatprep.subr.mxu0 0.0
    %114 = vmatpush2.msra.mxu0 0.0
    %115 = vmatprep.subr.mxu0 0.0
    %116 = vmatpush2.msra.mxu0 0.0
    %117 = vmatprep.subr.mxu0 0.0
    %118 = vmatpush2.msra.mxu0 0.0
    %119 = vmatprep.subr.mxu0 0.0
    %120 = vmatpush2.msra.mxu0 0.0
    %121 = vmatprep.subr.mxu0 0.0
    %122 = vmatpush2.msra.mxu0 0.0
    %123 = vmatprep.subr.mxu0 0.0
    %124 = vmatpush2.msra.mxu0 0.0
    %125 = vmatprep.subr.mxu0 0.0
    %126 = vmatpush2.msra.mxu0 0.0
    %127 = vmatprep.subr.mxu0 0.0
    %128 = vmatpush2.msra.mxu0 0.0
    %129 = vmatprep.subr.mxu0 0.0
    %130 = vmatpush2.msra.mxu0 0.0
    %131 = vmatprep.subr.mxu0 0.0
    %132 = vmatpush2.msra.mxu0 0.0
    %133 = vmatprep.subr.mxu0 0.0
    %134 = vmatpush2.msra.mxu0 0.0
    %135 = vmatprep.subr.mxu0 0.0
    %136 = vmatpush2.msra.mxu0 0.0
    %137 = vmatprep.mubr.f32.mxu0 0.0
    %138 = vmatmul.mubr.f32.gmra.mxu0 %v68
    %v139 = vpop.f32.mrf.mxu0
    %v140 = vadd.f32 0.0, %v139
    %v141 = vpop.f32.mrf.mxu0
    %142 = vmatprep.mubr.f32.mxu0 0.0
    %143 = vmatmul.mubr.f32.gmra.mxu0 %v71
    %v144 = vpop.f32.mrf.mxu0
    %v145 = vadd.f32 0.0, %v144
    %v146 = vpop.f32.mrf.mxu0
    %147 = vdwg.mxu0
    %v148 = vmul.f32 %v59, 0.5
    %v150 = vlaneseq
    %v151 = vshrl.u32 %v150, 7
    %v152 = vsub.s32 0, %v151
    %v153 = vrot.slane %v61, %v152
    %v155 = vadd.f32 %v148, %v153
    %157 = vrot.lane.b32.xlu0 %v140, 96
    %v158 = vpop.permute.xlu0 %157
    %vm159 = vcmask 64512
    %v160 = vsel %vm159, %v140, 0
    %v162 = vsel %vm159, %v158, 0
    %164 = vmatprep.subr.mxu0 0.0
    %165 = vmatpush1.xpose.msra.mxu0 0.0
    %166 = vmatprep.subr.mxu0 0.0
    %167 = vmatpush1.xpose.msra.mxu0 0.0
    %168 = vmatprep.subr.mxu0 0.0
    %169 = vmatpush1.xpose.msra.mxu0 0.0
    %170 = vmatprep.subr.mxu0 0.0
    %171 = vmatpush1.xpose.msra.mxu0 0.0
    %172 = vmatprep.subr.mxu0 0.0
    %173 = vmatpush1.xpose.msra.mxu0 0.0
    %174 = vmatprep.subr.mxu0 0.0
    %175 = vmatpush1.xpose.msra.mxu0 0.0
    %176 = vmatprep.subr.mxu0 0.0
    %177 = vmatpush1.xpose.msra.mxu0 0.0
    %178 = vmatprep.subr.mxu0 0.0
    %179 = vmatpush1.xpose.msra.mxu0 0.0
    %180 = vmatprep.subr.mxu0 0.0
    %181 = vmatpush1.xpose.msra.mxu0 0.0
    %182 = vmatprep.subr.mxu0 0.0
    %183 = vmatpush1.xpose.msra.mxu0 0.0
    %184 = vmatprep.subr.mxu0 0.0
    %185 = vmatpush1.xpose.msra.mxu0 0.0
    %186 = vmatprep.subr.mxu0 0.0
    %187 = vmatpush1.xpose.msra.mxu0 0.0
    %188 = vmatprep.subr.mxu0 0.0
    %189 = vmatpush1.xpose.msra.mxu0 0.0
    %190 = vmatprep.subr.mxu0 0.0
    %191 = vmatpush1.xpose.msra.mxu0 0.0
    %192 = vmatprep.subr.mxu0 0.0
    %193 = vmatpush1.xpose.msra.mxu0 0.0
    %194 = vmatprep.subr.mxu0 0.0
    %195 = vmatpush1.xpose.msra.mxu0 %v162
    %196 = vmatprep.subr.mxu0 0.0
    %197 = vmatpush2.xpose.msra.mxu0 0.0
    %198 = vmatprep.subr.mxu0 0.0
    %199 = vmatpush2.xpose.msra.mxu0 0.0
    %200 = vmatprep.subr.mxu0 0.0
    %201 = vmatpush2.xpose.msra.mxu0 0.0
    %202 = vmatprep.subr.mxu0 0.0
    %203 = vmatpush2.xpose.msra.mxu0 0.0
    %204 = vmatprep.subr.mxu0 0.0
    %205 = vmatpush2.xpose.msra.mxu0 0.0
    %206 = vmatprep.subr.mxu0 0.0
    %207 = vmatpush2.xpose.msra.mxu0 0.0
    %208 = vmatprep.subr.mxu0 0.0
    %209 = vmatpush2.xpose.msra.mxu0 0.0
    %210 = vmatprep.subr.mxu0 0.0
    %211 = vmatpush2.xpose.msra.mxu0 0.0
    %212 = vmatprep.subr.mxu0 0.0
    %213 = vmatpush2.xpose.msra.mxu0 0.0
    %214 = vmatprep.subr.mxu0 0.0
    %215 = vmatpush2.xpose.msra.mxu0 0.0
    %216 = vmatprep.subr.mxu0 0.0
    %217 = vmatpush2.xpose.msra.mxu0 0.0
    %218 = vmatprep.subr.mxu0 0.0
    %219 = vmatpush2.xpose.msra.mxu0 0.0
    %220 = vmatprep.subr.mxu0 0.0
    %221 = vmatpush2.xpose.msra.mxu0 0.0
    %222 = vmatprep.subr.mxu0 0.0
    %223 = vmatpush2.xpose.msra.mxu0 0.0
    %224 = vmatprep.subr.mxu0 0.0
    %225 = vmatpush2.xpose.msra.mxu0 0.0
    %226 = vmatprep.subr.mxu0 0.0
    %227 = vmatpush2.xpose.msra.mxu0 0.0
    %228 = vmatprep.mubr.f32.mxu0 0.0
    %229 = vmatmul.mubr.f32.gmra.mxu0 %v160
    %v230 = vpop.f32.mrf.mxu0
    %v231 = vadd.f32 0.0, %v230
    %v232 = vpop.f32.mrf.mxu0
    %233 = vdwg.mxu0
    %v234 = vsel %vm159, %v231, -inf
    %235 = vmax.xlane.f32.xlu0 %v234
    %v236 = vpop.xlane.xlu0 %235
    %v237 = vsub.f32 %v231, %v236
    %v238 = vmul.f32 %v237, 1.442695
    %v239 = vpow.pop %v238
    %v240 = vsel %vm159, %v239, 0.0
    %241 = vadd.xlane.f32.xlu0 %v240
    %v242 = vpop.xlane.xlu0 %241
    %243 = vrot.lane.b32.xlu0 %v140, 64
    %v244 = vpop.permute.xlu0 %243
    %v247 = vsel %vm159, %v239, 0
    %249 = vmatprep.subr.mxu0 0.0
    %250 = vmatpush1.msra.mxu0 0.0
    %251 = vmatprep.subr.mxu0 0.0
    %252 = vmatpush1.msra.mxu0 0.0
    %253 = vmatprep.subr.mxu0 0.0
    %254 = vmatpush1.msra.mxu0 0.0
    %255 = vmatprep.subr.mxu0 0.0
    %256 = vmatpush1.msra.mxu0 0.0
    %257 = vmatprep.subr.mxu0 0.0
    %258 = vmatpush1.msra.mxu0 0.0
    %259 = vmatprep.subr.mxu0 0.0
    %260 = vmatpush1.msra.mxu0 0.0
    %261 = vmatprep.subr.mxu0 0.0
    %262 = vmatpush1.msra.mxu0 0.0
    %263 = vmatprep.subr.mxu0 0.0
    %264 = vmatpush1.msra.mxu0 0.0
    %265 = vmatprep.subr.mxu0 0.0
    %266 = vmatpush1.msra.mxu0 0.0
    %267 = vmatprep.subr.mxu0 0.0
    %268 = vmatpush1.msra.mxu0 0.0
    %269 = vmatprep.subr.mxu0 0.0
    %270 = vmatpush1.msra.mxu0 0.0
    %271 = vmatprep.subr.mxu0 0.0
    %272 = vmatpush1.msra.mxu0 0.0
    %273 = vmatprep.subr.mxu0 0.0
    %274 = vmatpush1.msra.mxu0 0.0
    %275 = vmatprep.subr.mxu0 0.0
    %276 = vmatpush1.msra.mxu0 0.0
    %277 = vmatprep.subr.mxu0 0.0
    %278 = vmatpush1.msra.mxu0 0.0
    %279 = vmatprep.subr.mxu0 0.0
    %280 = vmatpush1.msra.mxu0 %v244
    %281 = vmatprep.subr.mxu0 0.0
    %282 = vmatpush2.msra.mxu0 0.0
    %283 = vmatprep.subr.mxu0 0.0
    %284 = vmatpush2.msra.mxu0 0.0
    %285 = vmatprep.subr.mxu0 0.0
    %286 = vmatpush2.msra.mxu0 0.0
    %287 = vmatprep.subr.mxu0 0.0
    %288 = vmatpush2.msra.mxu0 0.0
    %289 = vmatprep.subr.mxu0 0.0
    %290 = vmatpush2.msra.mxu0 0.0
    %291 = vmatprep.subr.mxu0 0.0
    %292 = vmatpush2.msra.mxu0 0.0
    %293 = vmatprep.subr.mxu0 0.0
    %294 = vmatpush2.msra.mxu0 0.0
    %295 = vmatprep.subr.mxu0 0.0
    %296 = vmatpush2.msra.mxu0 0.0
    %297 = vmatprep.subr.mxu0 0.0
    %298 = vmatpush2.msra.mxu0 0.0
    %299 = vmatprep.subr.mxu0 0.0
    %300 = vmatpush2.msra.mxu0 0.0
    %301 = vmatprep.subr.mxu0 0.0
    %302 = vmatpush2.msra.mxu0 0.0
    %303 = vmatprep.subr.mxu0 0.0
    %304 = vmatpush2.msra.mxu0 0.0
    %305 = vmatprep.subr.mxu0 0.0
    %306 = vmatpush2.msra.mxu0 0.0
    %307 = vmatprep.subr.mxu0 0.0
    %308 = vmatpush2.msra.mxu0 0.0
    %309 = vmatprep.subr.mxu0 0.0
    %310 = vmatpush2.msra.mxu0 0.0
    %311 = vmatprep.subr.mxu0 0.0
    %312 = vmatpush2.msra.mxu0 0.0
    %313 = vmatprep.mubr.f32.mxu0 0.0
    %314 = vmatmul.mubr.f32.gmra.mxu0 %v247
    %v315 = vpop.f32.mrf.mxu0
    %v316 = vadd.f32 0.0, %v315
    %v317 = vpop.f32.mrf.mxu0
    %318 = vdwg.mxu0
    %v319 = vrcp.pop %v242
    %v320 = vmul.f32 %v316, %v319
    %v321 = vld [vmem:[#allocation7] sm:$0xff]
    %v323 = vsel %vm159, %v320, 0
    %325 = vmatprep.subr.mxu0 0.0
    %326 = vmatpush1.msra.mxu0 0.0
    %327 = vmatprep.subr.mxu0 0.0
    %328 = vmatpush1.msra.mxu0 0.0
    %329 = vmatprep.subr.mxu0 0.0
    %330 = vmatpush1.msra.mxu0 0.0
    %331 = vmatprep.subr.mxu0 0.0
    %332 = vmatpush1.msra.mxu0 0.0
    %333 = vmatprep.subr.mxu0 0.0
    %334 = vmatpush1.msra.mxu0 0.0
    %335 = vmatprep.subr.mxu0 0.0
    %336 = vmatpush1.msra.mxu0 0.0
    %337 = vmatprep.subr.mxu0 0.0
    %338 = vmatpush1.msra.mxu0 0.0
    %339 = vmatprep.subr.mxu0 0.0
    %340 = vmatpush1.msra.mxu0 0.0
    %341 = vmatprep.subr.mxu0 0.0
    %342 = vmatpush1.msra.mxu0 0.0
    %343 = vmatprep.subr.mxu0 0.0
    %344 = vmatpush1.msra.mxu0 0.0
    %345 = vmatprep.subr.mxu0 0.0
    %346 = vmatpush1.msra.mxu0 0.0
    %347 = vmatprep.subr.mxu0 0.0
    %348 = vmatpush1.msra.mxu0 0.0
    %349 = vmatprep.subr.mxu0 0.0
    %350 = vmatpush1.msra.mxu0 0.0
    %351 = vmatprep.subr.mxu0 0.0
    %352 = vmatpush1.msra.mxu0 0.0
    %353 = vmatprep.subr.mxu0 0.0
    %354 = vmatpush1.msra.mxu0 0.0
    %355 = vmatprep.subr.mxu0 0.0
    %356 = vmatpush1.msra.mxu0 %v321
    %357 = vmatprep.subr.mxu0 0.0
    %358 = vmatpush2.msra.mxu0 0.0
    %359 = vmatprep.subr.mxu0 0.0
    %360 = vmatpush2.msra.mxu0 0.0
    %361 = vmatprep.subr.mxu0 0.0
    %362 = vmatpush2.msra.mxu0 0.0
    %363 = vmatprep.subr.mxu0 0.0
    %364 = vmatpush2.msra.mxu0 0.0
    %365 = vmatprep.subr.mxu0 0.0
    %366 = vmatpush2.msra.mxu0 0.0
    %367 = vmatprep.subr.mxu0 0.0
    %368 = vmatpush2.msra.mxu0 0.0
    %369 = vmatprep.subr.mxu0 0.0
    %370 = vmatpush2.msra.mxu0 0.0
    %371 = vmatprep.subr.mxu0 0.0
    %372 = vmatpush2.msra.mxu0 0.0
    %373 = vmatprep.subr.mxu0 0.0
    %374 = vmatpush2.msra.mxu0 0.0
    %375 = vmatprep.subr.mxu0 0.0
    %376 = vmatpush2.msra.mxu0 0.0
    %377 = vmatprep.subr.mxu0 0.0
    %378 = vmatpush2.msra.mxu0 0.0
    %379 = vmatprep.subr.mxu0 0.0
    %380 = vmatpush2.msra.mxu0 0.0
    %381 = vmatprep.subr.mxu0 0.0
    %382 = vmatpush2.msra.mxu0 0.0
    %383 = vmatprep.subr.mxu0 0.0
    %384 = vmatpush2.msra.mxu0 0.0
    %385 = vmatprep.subr.mxu0 0.0
    %386 = vmatpush2.msra.mxu0 0.0
    %387 = vmatprep.subr.mxu0 0.0
    %388 = vmatpush2.msra.mxu0 0.0
    %389 = vmatprep.mubr.f32.mxu0 0.0
    %390 = vmatmul.mubr.f32.gmra.mxu0 %v323
    %v391 = vpop.f32.mrf.mxu0
    %v392 = vadd.f32 0.0, %v391
    %v393 = vpop.f32.mrf.mxu0
    %394 = vdwg.mxu0
    %v395 = vadd.f32 %v155, %v392
    %396 = vrot.lane.b32.xlu0 %v140, 120
    %v397 = vpop.permute.xlu0 %396
    %398 = vrot.lane.b32.xlu0 %v140, 88
    %v399 = vpop.permute.xlu0 %398
    %v400 = vsel %vm159, %v397, 0
    %v402 = vsel %vm159, %v399, 0
    %404 = vmatprep.subr.mxu0 0.0
    %405 = vmatpush1.xpose.msra.mxu0 0.0
    %406 = vmatprep.subr.mxu0 0.0
    %407 = vmatpush1.xpose.msra.mxu0 0.0
    %408 = vmatprep.subr.mxu0 0.0
    %409 = vmatpush1.xpose.msra.mxu0 0.0
    %410 = vmatprep.subr.mxu0 0.0
    %411 = vmatpush1.xpose.msra.mxu0 0.0
    %412 = vmatprep.subr.mxu0 0.0
    %413 = vmatpush1.xpose.msra.mxu0 0.0
    %414 = vmatprep.subr.mxu0 0.0
    %415 = vmatpush1.xpose.msra.mxu0 0.0
    %416 = vmatprep.subr.mxu0 0.0
    %417 = vmatpush1.xpose.msra.mxu0 0.0
    %418 = vmatprep.subr.mxu0 0.0
    %419 = vmatpush1.xpose.msra.mxu0 0.0
    %420 = vmatprep.subr.mxu0 0.0
    %421 = vmatpush1.xpose.msra.mxu0 0.0
    %422 = vmatprep.subr.mxu0 0.0
    %423 = vmatpush1.xpose.msra.mxu0 0.0
    %424 = vmatprep.subr.mxu0 0.0
    %425 = vmatpush1.xpose.msra.mxu0 0.0
    %426 = vmatprep.subr.mxu0 0.0
    %427 = vmatpush1.xpose.msra.mxu0 0.0
    %428 = vmatprep.subr.mxu0 0.0
    %429 = vmatpush1.xpose.msra.mxu0 0.0
    %430 = vmatprep.subr.mxu0 0.0
    %431 = vmatpush1.xpose.msra.mxu0 0.0
    %432 = vmatprep.subr.mxu0 0.0
    %433 = vmatpush1.xpose.msra.mxu0 0.0
    %434 = vmatprep.subr.mxu0 0.0
    %435 = vmatpush1.xpose.msra.mxu0 %v402
    %436 = vmatprep.subr.mxu0 0.0
    %437 = vmatpush2.xpose.msra.mxu0 0.0
    %438 = vmatprep.subr.mxu0 0.0
    %439 = vmatpush2.xpose.msra.mxu0 0.0
    %440 = vmatprep.subr.mxu0 0.0
    %441 = vmatpush2.xpose.msra.mxu0 0.0
    %442 = vmatprep.subr.mxu0 0.0
    %443 = vmatpush2.xpose.msra.mxu0 0.0
    %444 = vmatprep.subr.mxu0 0.0
    %445 = vmatpush2.xpose.msra.mxu0 0.0
    %446 = vmatprep.subr.mxu0 0.0
    %447 = vmatpush2.xpose.msra.mxu0 0.0
    %448 = vmatprep.subr.mxu0 0.0
    %449 = vmatpush2.xpose.msra.mxu0 0.0
    %450 = vmatprep.subr.mxu0 0.0
    %451 = vmatpush2.xpose.msra.mxu0 0.0
    %452 = vmatprep.subr.mxu0 0.0
    %453 = vmatpush2.xpose.msra.mxu0 0.0
    %454 = vmatprep.subr.mxu0 0.0
    %455 = vmatpush2.xpose.msra.mxu0 0.0
    %456 = vmatprep.subr.mxu0 0.0
    %457 = vmatpush2.xpose.msra.mxu0 0.0
    %458 = vmatprep.subr.mxu0 0.0
    %459 = vmatpush2.xpose.msra.mxu0 0.0
    %460 = vmatprep.subr.mxu0 0.0
    %461 = vmatpush2.xpose.msra.mxu0 0.0
    %462 = vmatprep.subr.mxu0 0.0
    %463 = vmatpush2.xpose.msra.mxu0 0.0
    %464 = vmatprep.subr.mxu0 0.0
    %465 = vmatpush2.xpose.msra.mxu0 0.0
    %466 = vmatprep.subr.mxu0 0.0
    %467 = vmatpush2.xpose.msra.mxu0 0.0
    %468 = vmatprep.mubr.f32.mxu0 0.0
    %469 = vmatmul.mubr.f32.gmra.mxu0 %v400
    %v470 = vpop.f32.mrf.mxu0
    %v471 = vadd.f32 0.0, %v470
    %v472 = vpop.f32.mrf.mxu0
    %473 = vdwg.mxu0
    %v474 = vsel %vm159, %v471, -inf
    %475 = vmax.xlane.f32.xlu0 %v474
    %v476 = vpop.xlane.xlu0 %475
    %v477 = vsub.f32 %v471, %v476
    %v478 = vmul.f32 %v477, 1.442695
    %v479 = vpow.pop %v478
    %v480 = vsel %vm159, %v479, 0.0
    %481 = vadd.xlane.f32.xlu0 %v480
    %v482 = vpop.xlane.xlu0 %481
    %483 = vrot.lane.b32.xlu0 %v140, 56
    %v484 = vpop.permute.xlu0 %483
    %v487 = vsel %vm159, %v479, 0
    %489 = vmatprep.subr.mxu0 0.0
    %490 = vmatpush1.msra.mxu0 0.0
    %491 = vmatprep.subr.mxu0 0.0
    %492 = vmatpush1.msra.mxu0 0.0
    %493 = vmatprep.subr.mxu0 0.0
    %494 = vmatpush1.msra.mxu0 0.0
    %495 = vmatprep.subr.mxu0 0.0
    %496 = vmatpush1.msra.mxu0 0.0
    %497 = vmatprep.subr.mxu0 0.0
    %498 = vmatpush1.msra.mxu0 0.0
    %499 = vmatprep.subr.mxu0 0.0
    %500 = vmatpush1.msra.mxu0 0.0
    %501 = vmatprep.subr.mxu0 0.0
    %502 = vmatpush1.msra.mxu0 0.0
    %503 = vmatprep.subr.mxu0 0.0
    %504 = vmatpush1.msra.mxu0 0.0
    %505 = vmatprep.subr.mxu0 0.0
    %506 = vmatpush1.msra.mxu0 0.0
    %507 = vmatprep.subr.mxu0 0.0
    %508 = vmatpush1.msra.mxu0 0.0
    %509 = vmatprep.subr.mxu0 0.0
    %510 = vmatpush1.msra.mxu0 0.0
    %511 = vmatprep.subr.mxu0 0.0
    %512 = vmatpush1.msra.mxu0 0.0
    %513 = vmatprep.subr.mxu0 0.0
    %514 = vmatpush1.msra.mxu0 0.0
    %515 = vmatprep.subr.mxu0 0.0
    %516 = vmatpush1.msra.mxu0 0.0
    %517 = vmatprep.subr.mxu0 0.0
    %518 = vmatpush1.msra.mxu0 0.0
    %519 = vmatprep.subr.mxu0 0.0
    %520 = vmatpush1.msra.mxu0 %v484
    %521 = vmatprep.subr.mxu0 0.0
    %522 = vmatpush2.msra.mxu0 0.0
    %523 = vmatprep.subr.mxu0 0.0
    %524 = vmatpush2.msra.mxu0 0.0
    %525 = vmatprep.subr.mxu0 0.0
    %526 = vmatpush2.msra.mxu0 0.0
    %527 = vmatprep.subr.mxu0 0.0
    %528 = vmatpush2.msra.mxu0 0.0
    %529 = vmatprep.subr.mxu0 0.0
    %530 = vmatpush2.msra.mxu0 0.0
    %531 = vmatprep.subr.mxu0 0.0
    %532 = vmatpush2.msra.mxu0 0.0
    %533 = vmatprep.subr.mxu0 0.0
    %534 = vmatpush2.msra.mxu0 0.0
    %535 = vmatprep.subr.mxu0 0.0
    %536 = vmatpush2.msra.mxu0 0.0
    %537 = vmatprep.subr.mxu0 0.0
    %538 = vmatpush2.msra.mxu0 0.0
    %539 = vmatprep.subr.mxu0 0.0
    %540 = vmatpush2.msra.mxu0 0.0
    %541 = vmatprep.subr.mxu0 0.0
    %542 = vmatpush2.msra.mxu0 0.0
    %543 = vmatprep.subr.mxu0 0.0
    %544 = vmatpush2.msra.mxu0 0.0
    %545 = vmatprep.subr.mxu0 0.0
    %546 = vmatpush2.msra.mxu0 0.0
    %547 = vmatprep.subr.mxu0 0.0
    %548 = vmatpush2.msra.mxu0 0.0
    %549 = vmatprep.subr.mxu0 0.0
    %550 = vmatpush2.msra.mxu0 0.0
    %551 = vmatprep.subr.mxu0 0.0
    %552 = vmatpush2.msra.mxu0 0.0
    %553 = vmatprep.mubr.f32.mxu0 0.0
    %554 = vmatmul.mubr.f32.gmra.mxu0 %v487
    %v555 = vpop.f32.mrf.mxu0
    %v556 = vadd.f32 0.0, %v555
    %v557 = vpop.f32.mrf.mxu0
    %558 = vdwg.mxu0
    %v559 = vrcp.pop %v482
    %v560 = vmul.f32 %v556, %v559
    %v561 = vld [vmem:[#allocation7 + $0x8] sm:$0xff]
    %v563 = vsel %vm159, %v560, 0
    %565 = vmatprep.subr.mxu0 0.0
    %566 = vmatpush1.msra.mxu0 0.0
    %567 = vmatprep.subr.mxu0 0.0
    %568 = vmatpush1.msra.mxu0 0.0
    %569 = vmatprep.subr.mxu0 0.0
    %570 = vmatpush1.msra.mxu0 0.0
    %571 = vmatprep.subr.mxu0 0.0
    %572 = vmatpush1.msra.mxu0 0.0
    %573 = vmatprep.subr.mxu0 0.0
    %574 = vmatpush1.msra.mxu0 0.0
    %575 = vmatprep.subr.mxu0 0.0
    %576 = vmatpush1.msra.mxu0 0.0
    %577 = vmatprep.subr.mxu0 0.0
    %578 = vmatpush1.msra.mxu0 0.0
    %579 = vmatprep.subr.mxu0 0.0
    %580 = vmatpush1.msra.mxu0 0.0
    %581 = vmatprep.subr.mxu0 0.0
    %582 = vmatpush1.msra.mxu0 0.0
    %583 = vmatprep.subr.mxu0 0.0
    %584 = vmatpush1.msra.mxu0 0.0
    %585 = vmatprep.subr.mxu0 0.0
    %586 = vmatpush1.msra.mxu0 0.0
    %587 = vmatprep.subr.mxu0 0.0
    %588 = vmatpush1.msra.mxu0 0.0
    %589 = vmatprep.subr.mxu0 0.0
    %590 = vmatpush1.msra.mxu0 0.0
    %591 = vmatprep.subr.mxu0 0.0
    %592 = vmatpush1.msra.mxu0 0.0
    %593 = vmatprep.subr.mxu0 0.0
    %594 = vmatpush1.msra.mxu0 0.0
    %595 = vmatprep.subr.mxu0 0.0
    %596 = vmatpush1.msra.mxu0 %v561
    %597 = vmatprep.subr.mxu0 0.0
    %598 = vmatpush2.msra.mxu0 0.0
    %599 = vmatprep.subr.mxu0 0.0
    %600 = vmatpush2.msra.mxu0 0.0
    %601 = vmatprep.subr.mxu0 0.0
    %602 = vmatpush2.msra.mxu0 0.0
    %603 = vmatprep.subr.mxu0 0.0
    %604 = vmatpush2.msra.mxu0 0.0
    %605 = vmatprep.subr.mxu0 0.0
    %606 = vmatpush2.msra.mxu0 0.0
    %607 = vmatprep.subr.mxu0 0.0
    %608 = vmatpush2.msra.mxu0 0.0
    %609 = vmatprep.subr.mxu0 0.0
    %610 = vmatpush2.msra.mxu0 0.0
    %611 = vmatprep.subr.mxu0 0.0
    %612 = vmatpush2.msra.mxu0 0.0
    %613 = vmatprep.subr.mxu0 0.0
    %614 = vmatpush2.msra.mxu0 0.0
    %615 = vmatprep.subr.mxu0 0.0
    %616 = vmatpush2.msra.mxu0 0.0
    %617 = vmatprep.subr.mxu0 0.0
    %618 = vmatpush2.msra.mxu0 0.0
    %619 = vmatprep.subr.mxu0 0.0
    %620 = vmatpush2.msra.mxu0 0.0
    %621 = vmatprep.subr.mxu0 0.0
    %622 = vmatpush2.msra.mxu0 0.0
    %623 = vmatprep.subr.mxu0 0.0
    %624 = vmatpush2.msra.mxu0 0.0
    %625 = vmatprep.subr.mxu0 0.0
    %626 = vmatpush2.msra.mxu0 0.0
    %627 = vmatprep.subr.mxu0 0.0
    %628 = vmatpush2.msra.mxu0 0.0
    %629 = vmatprep.mubr.f32.mxu0 0.0
    %630 = vmatmul.mubr.f32.gmra.mxu0 %v563
    %v631 = vpop.f32.mrf.mxu0
    %v632 = vadd.f32 0.0, %v631
    %v633 = vpop.f32.mrf.mxu0
    %634 = vdwg.mxu0
    %v635 = vadd.f32 %v395, %v632
    %636 = vrot.lane.b32.xlu0 %v140, 112
    %v637 = vpop.permute.xlu0 %636
    %638 = vrot.lane.b32.xlu0 %v140, 80
    %v639 = vpop.permute.xlu0 %638
    %v640 = vsel %vm159, %v637, 0
    %v642 = vsel %vm159, %v639, 0
    %644 = vmatprep.subr.mxu0 0.0
    %645 = vmatpush1.xpose.msra.mxu0 0.0
    %646 = vmatprep.subr.mxu0 0.0
    %647 = vmatpush1.xpose.msra.mxu0 0.0
    %648 = vmatprep.subr.mxu0 0.0
    %649 = vmatpush1.xpose.msra.mxu0 0.0
    %650 = vmatprep.subr.mxu0 0.0
    %651 = vmatpush1.xpose.msra.mxu0 0.0
    %652 = vmatprep.subr.mxu0 0.0
    %653 = vmatpush1.xpose.msra.mxu0 0.0
    %654 = vmatprep.subr.mxu0 0.0
    %655 = vmatpush1.xpose.msra.mxu0 0.0
    %656 = vmatprep.subr.mxu0 0.0
    %657 = vmatpush1.xpose.msra.mxu0 0.0
    %658 = vmatprep.subr.mxu0 0.0
    %659 = vmatpush1.xpose.msra.mxu0 0.0
    %660 = vmatprep.subr.mxu0 0.0
    %661 = vmatpush1.xpose.msra.mxu0 0.0
    %662 = vmatprep.subr.mxu0 0.0
    %663 = vmatpush1.xpose.msra.mxu0 0.0
    %664 = vmatprep.subr.mxu0 0.0
    %665 = vmatpush1.xpose.msra.mxu0 0.0
    %666 = vmatprep.subr.mxu0 0.0
    %667 = vmatpush1.xpose.msra.mxu0 0.0
    %668 = vmatprep.subr.mxu0 0.0
    %669 = vmatpush1.xpose.msra.mxu0 0.0
    %670 = vmatprep.subr.mxu0 0.0
    %671 = vmatpush1.xpose.msra.mxu0 0.0
    %672 = vmatprep.subr.mxu0 0.0
    %673 = vmatpush1.xpose.msra.mxu0 0.0
    %674 = vmatprep.subr.mxu0 0.0
    %675 = vmatpush1.xpose.msra.mxu0 %v642
    %676 = vmatprep.subr.mxu0 0.0
    %677 = vmatpush2.xpose.msra.mxu0 0.0
    %678 = vmatprep.subr.mxu0 0.0
    %679 = vmatpush2.xpose.msra.mxu0 0.0
    %680 = vmatprep.subr.mxu0 0.0
    %681 = vmatpush2.xpose.msra.mxu0 0.0
    %682 = vmatprep.subr.mxu0 0.0
    %683 = vmatpush2.xpose.msra.mxu0 0.0
    %684 = vmatprep.subr.mxu0 0.0
    %685 = vmatpush2.xpose.msra.mxu0 0.0
    %686 = vmatprep.subr.mxu0 0.0
    %687 = vmatpush2.xpose.msra.mxu0 0.0
    %688 = vmatprep.subr.mxu0 0.0
    %689 = vmatpush2.xpose.msra.mxu0 0.0
    %690 = vmatprep.subr.mxu0 0.0
    %691 = vmatpush2.xpose.msra.mxu0 0.0
    %692 = vmatprep.subr.mxu0 0.0
    %693 = vmatpush2.xpose.msra.mxu0 0.0
    %694 = vmatprep.subr.mxu0 0.0
    %695 = vmatpush2.xpose.msra.mxu0 0.0
    %696 = vmatprep.subr.mxu0 0.0
    %697 = vmatpush2.xpose.msra.mxu0 0.0
    %698 = vmatprep.subr.mxu0 0.0
    %699 = vmatpush2.xpose.msra.mxu0 0.0
    %700 = vmatprep.subr.mxu0 0.0
    %701 = vmatpush2.xpose.msra.mxu0 0.0
    %702 = vmatprep.subr.mxu0 0.0
    %703 = vmatpush2.xpose.msra.mxu0 0.0
    %704 = vmatprep.subr.mxu0 0.0
    %705 = vmatpush2.xpose.msra.mxu0 0.0
    %706 = vmatprep.subr.mxu0 0.0
    %707 = vmatpush2.xpose.msra.mxu0 0.0
    %708 = vmatprep.mubr.f32.mxu0 0.0
    %709 = vmatmul.mubr.f32.gmra.mxu0 %v640
    %v710 = vpop.f32.mrf.mxu0
    %v711 = vadd.f32 0.0, %v710
    %v712 = vpop.f32.mrf.mxu0
    %713 = vdwg.mxu0
    %v714 = vsel %vm159, %v711, -inf
    %715 = vmax.xlane.f32.xlu0 %v714
    %v716 = vpop.xlane.xlu0 %715
    %v717 = vsub.f32 %v711, %v716
    %v718 = vmul.f32 %v717, 1.442695
    %v719 = vpow.pop %v718
    %v720 = vsel %vm159, %v719, 0.0
    %721 = vadd.xlane.f32.xlu0 %v720
    %v722 = vpop.xlane.xlu0 %721
    %723 = vrot.lane.b32.xlu0 %v140, 48
    %v724 = vpop.permute.xlu0 %723
    %v727 = vsel %vm159, %v719, 0
    %729 = vmatprep.subr.mxu0 0.0
    %730 = vmatpush1.msra.mxu0 0.0
    %731 = vmatprep.subr.mxu0 0.0
    %732 = vmatpush1.msra.mxu0 0.0
    %733 = vmatprep.subr.mxu0 0.0
    %734 = vmatpush1.msra.mxu0 0.0
    %735 = vmatprep.subr.mxu0 0.0
    %736 = vmatpush1.msra.mxu0 0.0
    %737 = vmatprep.subr.mxu0 0.0
    %738 = vmatpush1.msra.mxu0 0.0
    %739 = vmatprep.subr.mxu0 0.0
    %740 = vmatpush1.msra.mxu0 0.0
    %741 = vmatprep.subr.mxu0 0.0
    %742 = vmatpush1.msra.mxu0 0.0
    %743 = vmatprep.subr.mxu0 0.0
    %744 = vmatpush1.msra.mxu0 0.0
    %745 = vmatprep.subr.mxu0 0.0
    %746 = vmatpush1.msra.mxu0 0.0
    %747 = vmatprep.subr.mxu0 0.0
    %748 = vmatpush1.msra.mxu0 0.0
    %749 = vmatprep.subr.mxu0 0.0
    %750 = vmatpush1.msra.mxu0 0.0
    %751 = vmatprep.subr.mxu0 0.0
    %752 = vmatpush1.msra.mxu0 0.0
    %753 = vmatprep.subr.mxu0 0.0
    %754 = vmatpush1.msra.mxu0 0.0
    %755 = vmatprep.subr.mxu0 0.0
    %756 = vmatpush1.msra.mxu0 0.0
    %757 = vmatprep.subr.mxu0 0.0
    %758 = vmatpush1.msra.mxu0 0.0
    %759 = vmatprep.subr.mxu0 0.0
    %760 = vmatpush1.msra.mxu0 %v724
    %761 = vmatprep.subr.mxu0 0.0
    %762 = vmatpush2.msra.mxu0 0.0
    %763 = vmatprep.subr.mxu0 0.0
    %764 = vmatpush2.msra.mxu0 0.0
    %765 = vmatprep.subr.mxu0 0.0
    %766 = vmatpush2.msra.mxu0 0.0
    %767 = vmatprep.subr.mxu0 0.0
    %768 = vmatpush2.msra.mxu0 0.0
    %769 = vmatprep.subr.mxu0 0.0
    %770 = vmatpush2.msra.mxu0 0.0
    %771 = vmatprep.subr.mxu0 0.0
    %772 = vmatpush2.msra.mxu0 0.0
    %773 = vmatprep.subr.mxu0 0.0
    %774 = vmatpush2.msra.mxu0 0.0
    %775 = vmatprep.subr.mxu0 0.0
    %776 = vmatpush2.msra.mxu0 0.0
    %777 = vmatprep.subr.mxu0 0.0
    %778 = vmatpush2.msra.mxu0 0.0
    %779 = vmatprep.subr.mxu0 0.0
    %780 = vmatpush2.msra.mxu0 0.0
    %781 = vmatprep.subr.mxu0 0.0
    %782 = vmatpush2.msra.mxu0 0.0
    %783 = vmatprep.subr.mxu0 0.0
    %784 = vmatpush2.msra.mxu0 0.0
    %785 = vmatprep.subr.mxu0 0.0
    %786 = vmatpush2.msra.mxu0 0.0
    %787 = vmatprep.subr.mxu0 0.0
    %788 = vmatpush2.msra.mxu0 0.0
    %789 = vmatprep.subr.mxu0 0.0
    %790 = vmatpush2.msra.mxu0 0.0
    %791 = vmatprep.subr.mxu0 0.0
    %792 = vmatpush2.msra.mxu0 0.0
    %793 = vmatprep.mubr.f32.mxu0 0.0
    %794 = vmatmul.mubr.f32.gmra.mxu0 %v727
    %v795 = vpop.f32.mrf.mxu0
    %v796 = vadd.f32 0.0, %v795
    %v797 = vpop.f32.mrf.mxu0
    %798 = vdwg.mxu0
    %v799 = vrcp.pop %v722
    %v800 = vmul.f32 %v796, %v799
    %v801 = vld [vmem:[#allocation7 + $0x10] sm:$0xff]
    %v803 = vsel %vm159, %v800, 0
    %805 = vmatprep.subr.mxu0 0.0
    %806 = vmatpush1.msra.mxu0 0.0
    %807 = vmatprep.subr.mxu0 0.0
    %808 = vmatpush1.msra.mxu0 0.0
    %809 = vmatprep.subr.mxu0 0.0
    %810 = vmatpush1.msra.mxu0 0.0
    %811 = vmatprep.subr.mxu0 0.0
    %812 = vmatpush1.msra.mxu0 0.0
    %813 = vmatprep.subr.mxu0 0.0
    %814 = vmatpush1.msra.mxu0 0.0
    %815 = vmatprep.subr.mxu0 0.0
    %816 = vmatpush1.msra.mxu0 0.0
    %817 = vmatprep.subr.mxu0 0.0
    %818 = vmatpush1.msra.mxu0 0.0
    %819 = vmatprep.subr.mxu0 0.0
    %820 = vmatpush1.msra.mxu0 0.0
    %821 = vmatprep.subr.mxu0 0.0
    %822 = vmatpush1.msra.mxu0 0.0
    %823 = vmatprep.subr.mxu0 0.0
    %824 = vmatpush1.msra.mxu0 0.0
    %825 = vmatprep.subr.mxu0 0.0
    %826 = vmatpush1.msra.mxu0 0.0
    %827 = vmatprep.subr.mxu0 0.0
    %828 = vmatpush1.msra.mxu0 0.0
    %829 = vmatprep.subr.mxu0 0.0
    %830 = vmatpush1.msra.mxu0 0.0
    %831 = vmatprep.subr.mxu0 0.0
    %832 = vmatpush1.msra.mxu0 0.0
    %833 = vmatprep.subr.mxu0 0.0
    %834 = vmatpush1.msra.mxu0 0.0
    %835 = vmatprep.subr.mxu0 0.0
    %836 = vmatpush1.msra.mxu0 %v801
    %837 = vmatprep.subr.mxu0 0.0
    %838 = vmatpush2.msra.mxu0 0.0
    %839 = vmatprep.subr.mxu0 0.0
    %840 = vmatpush2.msra.mxu0 0.0
    %841 = vmatprep.subr.mxu0 0.0
    %842 = vmatpush2.msra.mxu0 0.0
    %843 = vmatprep.subr.mxu0 0.0
    %844 = vmatpush2.msra.mxu0 0.0
    %845 = vmatprep.subr.mxu0 0.0
    %846 = vmatpush2.msra.mxu0 0.0
    %847 = vmatprep.subr.mxu0 0.0
    %848 = vmatpush2.msra.mxu0 0.0
    %849 = vmatprep.subr.mxu0 0.0
    %850 = vmatpush2.msra.mxu0 0.0
    %851 = vmatprep.subr.mxu0 0.0
    %852 = vmatpush2.msra.mxu0 0.0
    %853 = vmatprep.subr.mxu0 0.0
    %854 = vmatpush2.msra.mxu0 0.0
    %855 = vmatprep.subr.mxu0 0.0
    %856 = vmatpush2.msra.mxu0 0.0
    %857 = vmatprep.subr.mxu0 0.0
    %858 = vmatpush2.msra.mxu0 0.0
    %859 = vmatprep.subr.mxu0 0.0
    %860 = vmatpush2.msra.mxu0 0.0
    %861 = vmatprep.subr.mxu0 0.0
    %862 = vmatpush2.msra.mxu0 0.0
    %863 = vmatprep.subr.mxu0 0.0
    %864 = vmatpush2.msra.mxu0 0.0
    %865 = vmatprep.subr.mxu0 0.0
    %866 = vmatpush2.msra.mxu0 0.0
    %867 = vmatprep.subr.mxu0 0.0
    %868 = vmatpush2.msra.mxu0 0.0
    %869 = vmatprep.mubr.f32.mxu0 0.0
    %870 = vmatmul.mubr.f32.gmra.mxu0 %v803
    %v871 = vpop.f32.mrf.mxu0
    %v872 = vadd.f32 0.0, %v871
    %v873 = vpop.f32.mrf.mxu0
    %874 = vdwg.mxu0
    %v875 = vadd.f32 %v635, %v872
    %876 = vrot.lane.b32.xlu0 %v140, 104
    %v877 = vpop.permute.xlu0 %876
    %878 = vrot.lane.b32.xlu0 %v140, 72
    %v879 = vpop.permute.xlu0 %878
    %v880 = vsel %vm159, %v877, 0
    %v882 = vsel %vm159, %v879, 0
    %884 = vmatprep.subr.mxu0 0.0
    %885 = vmatpush1.xpose.msra.mxu0 0.0
    %886 = vmatprep.subr.mxu0 0.0
    %887 = vmatpush1.xpose.msra.mxu0 0.0
    %888 = vmatprep.subr.mxu0 0.0
    %889 = vmatpush1.xpose.msra.mxu0 0.0
    %890 = vmatprep.subr.mxu0 0.0
    %891 = vmatpush1.xpose.msra.mxu0 0.0
    %892 = vmatprep.subr.mxu0 0.0
    %893 = vmatpush1.xpose.msra.mxu0 0.0
    %894 = vmatprep.subr.mxu0 0.0
    %895 = vmatpush1.xpose.msra.mxu0 0.0
    %896 = vmatprep.subr.mxu0 0.0
    %897 = vmatpush1.xpose.msra.mxu0 0.0
    %898 = vmatprep.subr.mxu0 0.0
    %899 = vmatpush1.xpose.msra.mxu0 0.0
    %900 = vmatprep.subr.mxu0 0.0
    %901 = vmatpush1.xpose.msra.mxu0 0.0
    %902 = vmatprep.subr.mxu0 0.0
    %903 = vmatpush1.xpose.msra.mxu0 0.0
    %904 = vmatprep.subr.mxu0 0.0
    %905 = vmatpush1.xpose.msra.mxu0 0.0
    %906 = vmatprep.subr.mxu0 0.0
    %907 = vmatpush1.xpose.msra.mxu0 0.0
    %908 = vmatprep.subr.mxu0 0.0
    %909 = vmatpush1.xpose.msra.mxu0 0.0
    %910 = vmatprep.subr.mxu0 0.0
    %911 = vmatpush1.xpose.msra.mxu0 0.0
    %912 = vmatprep.subr.mxu0 0.0
    %913 = vmatpush1.xpose.msra.mxu0 0.0
    %914 = vmatprep.subr.mxu0 0.0
    %915 = vmatpush1.xpose.msra.mxu0 %v882
    %916 = vmatprep.subr.mxu0 0.0
    %917 = vmatpush2.xpose.msra.mxu0 0.0
    %918 = vmatprep.subr.mxu0 0.0
    %919 = vmatpush2.xpose.msra.mxu0 0.0
    %920 = vmatprep.subr.mxu0 0.0
    %921 = vmatpush2.xpose.msra.mxu0 0.0
    %922 = vmatprep.subr.mxu0 0.0
    %923 = vmatpush2.xpose.msra.mxu0 0.0
    %924 = vmatprep.subr.mxu0 0.0
    %925 = vmatpush2.xpose.msra.mxu0 0.0
    %926 = vmatprep.subr.mxu0 0.0
    %927 = vmatpush2.xpose.msra.mxu0 0.0
    %928 = vmatprep.subr.mxu0 0.0
    %929 = vmatpush2.xpose.msra.mxu0 0.0
    %930 = vmatprep.subr.mxu0 0.0
    %931 = vmatpush2.xpose.msra.mxu0 0.0
    %932 = vmatprep.subr.mxu0 0.0
    %933 = vmatpush2.xpose.msra.mxu0 0.0
    %934 = vmatprep.subr.mxu0 0.0
    %935 = vmatpush2.xpose.msra.mxu0 0.0
    %936 = vmatprep.subr.mxu0 0.0
    %937 = vmatpush2.xpose.msra.mxu0 0.0
    %938 = vmatprep.subr.mxu0 0.0
    %939 = vmatpush2.xpose.msra.mxu0 0.0
    %940 = vmatprep.subr.mxu0 0.0
    %941 = vmatpush2.xpose.msra.mxu0 0.0
    %942 = vmatprep.subr.mxu0 0.0
    %943 = vmatpush2.xpose.msra.mxu0 0.0
    %944 = vmatprep.subr.mxu0 0.0
    %945 = vmatpush2.xpose.msra.mxu0 0.0
    %946 = vmatprep.subr.mxu0 0.0
    %947 = vmatpush2.xpose.msra.mxu0 0.0
    %948 = vmatprep.mubr.f32.mxu0 0.0
    %949 = vmatmul.mubr.f32.gmra.mxu0 %v880
    %v950 = vpop.f32.mrf.mxu0
    %v951 = vadd.f32 0.0, %v950
    %v952 = vpop.f32.mrf.mxu0
    %953 = vdwg.mxu0
    %v954 = vsel %vm159, %v951, -inf
    %955 = vmax.xlane.f32.xlu0 %v954
    %v956 = vpop.xlane.xlu0 %955
    %v957 = vsub.f32 %v951, %v956
    %v958 = vmul.f32 %v957, 1.442695
    %v959 = vpow.pop %v958
    %v960 = vsel %vm159, %v959, 0.0
    %961 = vadd.xlane.f32.xlu0 %v960
    %v962 = vpop.xlane.xlu0 %961
    %963 = vrot.lane.b32.xlu0 %v140, 40
    %v964 = vpop.permute.xlu0 %963
    %v967 = vsel %vm159, %v959, 0
    %969 = vmatprep.subr.mxu0 0.0
    %970 = vmatpush1.msra.mxu0 0.0
    %971 = vmatprep.subr.mxu0 0.0
    %972 = vmatpush1.msra.mxu0 0.0
    %973 = vmatprep.subr.mxu0 0.0
    %974 = vmatpush1.msra.mxu0 0.0
    %975 = vmatprep.subr.mxu0 0.0
    %976 = vmatpush1.msra.mxu0 0.0
    %977 = vmatprep.subr.mxu0 0.0
    %978 = vmatpush1.msra.mxu0 0.0
    %979 = vmatprep.subr.mxu0 0.0
    %980 = vmatpush1.msra.mxu0 0.0
    %981 = vmatprep.subr.mxu0 0.0
    %982 = vmatpush1.msra.mxu0 0.0
    %983 = vmatprep.subr.mxu0 0.0
    %984 = vmatpush1.msra.mxu0 0.0
    %985 = vmatprep.subr.mxu0 0.0
    %986 = vmatpush1.msra.mxu0 0.0
    %987 = vmatprep.subr.mxu0 0.0
    %988 = vmatpush1.msra.mxu0 0.0
    %989 = vmatprep.subr.mxu0 0.0
    %990 = vmatpush1.msra.mxu0 0.0
    %991 = vmatprep.subr.mxu0 0.0
    %992 = vmatpush1.msra.mxu0 0.0
    %993 = vmatprep.subr.mxu0 0.0
    %994 = vmatpush1.msra.mxu0 0.0
    %995 = vmatprep.subr.mxu0 0.0
    %996 = vmatpush1.msra.mxu0 0.0
    %997 = vmatprep.subr.mxu0 0.0
    %998 = vmatpush1.msra.mxu0 0.0
    %999 = vmatprep.subr.mxu0 0.0
    %1000 = vmatpush1.msra.mxu0 %v964
    %1001 = vmatprep.subr.mxu0 0.0
    %1002 = vmatpush2.msra.mxu0 0.0
    %1003 = vmatprep.subr.mxu0 0.0
    %1004 = vmatpush2.msra.mxu0 0.0
    %1005 = vmatprep.subr.mxu0 0.0
    %1006 = vmatpush2.msra.mxu0 0.0
    %1007 = vmatprep.subr.mxu0 0.0
    %1008 = vmatpush2.msra.mxu0 0.0
    %1009 = vmatprep.subr.mxu0 0.0
    %1010 = vmatpush2.msra.mxu0 0.0
    %1011 = vmatprep.subr.mxu0 0.0
    %1012 = vmatpush2.msra.mxu0 0.0
    %1013 = vmatprep.subr.mxu0 0.0
    %1014 = vmatpush2.msra.mxu0 0.0
    %1015 = vmatprep.subr.mxu0 0.0
    %1016 = vmatpush2.msra.mxu0 0.0
    %1017 = vmatprep.subr.mxu0 0.0
    %1018 = vmatpush2.msra.mxu0 0.0
    %1019 = vmatprep.subr.mxu0 0.0
    %1020 = vmatpush2.msra.mxu0 0.0
    %1021 = vmatprep.subr.mxu0 0.0
    %1022 = vmatpush2.msra.mxu0 0.0
    %1023 = vmatprep.subr.mxu0 0.0
    %1024 = vmatpush2.msra.mxu0 0.0
    %1025 = vmatprep.subr.mxu0 0.0
    %1026 = vmatpush2.msra.mxu0 0.0
    %1027 = vmatprep.subr.mxu0 0.0
    %1028 = vmatpush2.msra.mxu0 0.0
    %1029 = vmatprep.subr.mxu0 0.0
    %1030 = vmatpush2.msra.mxu0 0.0
    %1031 = vmatprep.subr.mxu0 0.0
    %1032 = vmatpush2.msra.mxu0 0.0
    %1033 = vmatprep.mubr.f32.mxu0 0.0
    %1034 = vmatmul.mubr.f32.gmra.mxu0 %v967
    %v1035 = vpop.f32.mrf.mxu0
    %v1036 = vadd.f32 0.0, %v1035
    %v1037 = vpop.f32.mrf.mxu0
    %1038 = vdwg.mxu0
    %v1039 = vrcp.pop %v962
    %v1040 = vmul.f32 %v1036, %v1039
    %v1041 = vld [vmem:[#allocation7 + $0x18] sm:$0xff]
    %v1043 = vsel %vm159, %v1040, 0
    %1045 = vmatprep.subr.mxu0 0.0
    %1046 = vmatpush1.msra.mxu0 0.0
    %1047 = vmatprep.subr.mxu0 0.0
    %1048 = vmatpush1.msra.mxu0 0.0
    %1049 = vmatprep.subr.mxu0 0.0
    %1050 = vmatpush1.msra.mxu0 0.0
    %1051 = vmatprep.subr.mxu0 0.0
    %1052 = vmatpush1.msra.mxu0 0.0
    %1053 = vmatprep.subr.mxu0 0.0
    %1054 = vmatpush1.msra.mxu0 0.0
    %1055 = vmatprep.subr.mxu0 0.0
    %1056 = vmatpush1.msra.mxu0 0.0
    %1057 = vmatprep.subr.mxu0 0.0
    %1058 = vmatpush1.msra.mxu0 0.0
    %1059 = vmatprep.subr.mxu0 0.0
    %1060 = vmatpush1.msra.mxu0 0.0
    %1061 = vmatprep.subr.mxu0 0.0
    %1062 = vmatpush1.msra.mxu0 0.0
    %1063 = vmatprep.subr.mxu0 0.0
    %1064 = vmatpush1.msra.mxu0 0.0
    %1065 = vmatprep.subr.mxu0 0.0
    %1066 = vmatpush1.msra.mxu0 0.0
    %1067 = vmatprep.subr.mxu0 0.0
    %1068 = vmatpush1.msra.mxu0 0.0
    %1069 = vmatprep.subr.mxu0 0.0
    %1070 = vmatpush1.msra.mxu0 0.0
    %1071 = vmatprep.subr.mxu0 0.0
    %1072 = vmatpush1.msra.mxu0 0.0
    %1073 = vmatprep.subr.mxu0 0.0
    %1074 = vmatpush1.msra.mxu0 0.0
    %1075 = vmatprep.subr.mxu0 0.0
    %1076 = vmatpush1.msra.mxu0 %v1041
    %1077 = vmatprep.subr.mxu0 0.0
    %1078 = vmatpush2.msra.mxu0 0.0
    %1079 = vmatprep.subr.mxu0 0.0
    %1080 = vmatpush2.msra.mxu0 0.0
    %1081 = vmatprep.subr.mxu0 0.0
    %1082 = vmatpush2.msra.mxu0 0.0
    %1083 = vmatprep.subr.mxu0 0.0
    %1084 = vmatpush2.msra.mxu0 0.0
    %1085 = vmatprep.subr.mxu0 0.0
    %1086 = vmatpush2.msra.mxu0 0.0
    %1087 = vmatprep.subr.mxu0 0.0
    %1088 = vmatpush2.msra.mxu0 0.0
    %1089 = vmatprep.subr.mxu0 0.0
    %1090 = vmatpush2.msra.mxu0 0.0
    %1091 = vmatprep.subr.mxu0 0.0
    %1092 = vmatpush2.msra.mxu0 0.0
    %1093 = vmatprep.subr.mxu0 0.0
    %1094 = vmatpush2.msra.mxu0 0.0
    %1095 = vmatprep.subr.mxu0 0.0
    %1096 = vmatpush2.msra.mxu0 0.0
    %1097 = vmatprep.subr.mxu0 0.0
    %1098 = vmatpush2.msra.mxu0 0.0
    %1099 = vmatprep.subr.mxu0 0.0
    %1100 = vmatpush2.msra.mxu0 0.0
    %1101 = vmatprep.subr.mxu0 0.0
    %1102 = vmatpush2.msra.mxu0 0.0
    %1103 = vmatprep.subr.mxu0 0.0
    %1104 = vmatpush2.msra.mxu0 0.0
    %1105 = vmatprep.subr.mxu0 0.0
    %1106 = vmatpush2.msra.mxu0 0.0
    %1107 = vmatprep.subr.mxu0 0.0
    %1108 = vmatpush2.msra.mxu0 0.0
    %1109 = vmatprep.mubr.f32.mxu0 0.0
    %1110 = vmatmul.mubr.f32.gmra.mxu0 %v1043
    %v1111 = vpop.f32.mrf.mxu0
    %v1112 = vadd.f32 0.0, %v1111
    %v1113 = vpop.f32.mrf.mxu0
    %1114 = vdwg.mxu0
    %v1115 = vadd.f32 %v875, %v1112
    %1116 = vst.msk [vmem:[#allocation8] sm:$0xff] %vm66, %v1115
    %v1117 = vmul.f32 %v60, 0.5
    %v1118 = vadd.f32 %v1117, %v153
    %1120 = vrot.lane.b32.xlu0 %v145, 96
    %v1121 = vpop.permute.xlu0 %1120
    %v1122 = vsel %vm159, %v145, 0
    %v1124 = vsel %vm159, %v1121, 0
    %1126 = vmatprep.subr.mxu0 0.0
    %1127 = vmatpush1.xpose.msra.mxu0 0.0
    %1128 = vmatprep.subr.mxu0 0.0
    %1129 = vmatpush1.xpose.msra.mxu0 0.0
    %1130 = vmatprep.subr.mxu0 0.0
    %1131 = vmatpush1.xpose.msra.mxu0 0.0
    %1132 = vmatprep.subr.mxu0 0.0
    %1133 = vmatpush1.xpose.msra.mxu0 0.0
    %1134 = vmatprep.subr.mxu0 0.0
    %1135 = vmatpush1.xpose.msra.mxu0 0.0
    %1136 = vmatprep.subr.mxu0 0.0
    %1137 = vmatpush1.xpose.msra.mxu0 0.0
    %1138 = vmatprep.subr.mxu0 0.0
    %1139 = vmatpush1.xpose.msra.mxu0 0.0
    %1140 = vmatprep.subr.mxu0 0.0
    %1141 = vmatpush1.xpose.msra.mxu0 0.0
    %1142 = vmatprep.subr.mxu0 0.0
    %1143 = vmatpush1.xpose.msra.mxu0 0.0
    %1144 = vmatprep.subr.mxu0 0.0
    %1145 = vmatpush1.xpose.msra.mxu0 0.0
    %1146 = vmatprep.subr.mxu0 0.0
    %1147 = vmatpush1.xpose.msra.mxu0 0.0
    %1148 = vmatprep.subr.mxu0 0.0
    %1149 = vmatpush1.xpose.msra.mxu0 0.0
    %1150 = vmatprep.subr.mxu0 0.0
    %1151 = vmatpush1.xpose.msra.mxu0 0.0
    %1152 = vmatprep.subr.mxu0 0.0
    %1153 = vmatpush1.xpose.msra.mxu0 0.0
    %1154 = vmatprep.subr.mxu0 0.0
    %1155 = vmatpush1.xpose.msra.mxu0 0.0
    %1156 = vmatprep.subr.mxu0 0.0
    %1157 = vmatpush1.xpose.msra.mxu0 %v1124
    %1158 = vmatprep.subr.mxu0 0.0
    %1159 = vmatpush2.xpose.msra.mxu0 0.0
    %1160 = vmatprep.subr.mxu0 0.0
    %1161 = vmatpush2.xpose.msra.mxu0 0.0
    %1162 = vmatprep.subr.mxu0 0.0
    %1163 = vmatpush2.xpose.msra.mxu0 0.0
    %1164 = vmatprep.subr.mxu0 0.0
    %1165 = vmatpush2.xpose.msra.mxu0 0.0
    %1166 = vmatprep.subr.mxu0 0.0
    %1167 = vmatpush2.xpose.msra.mxu0 0.0
    %1168 = vmatprep.subr.mxu0 0.0
    %1169 = vmatpush2.xpose.msra.mxu0 0.0
    %1170 = vmatprep.subr.mxu0 0.0
    %1171 = vmatpush2.xpose.msra.mxu0 0.0
    %1172 = vmatprep.subr.mxu0 0.0
    %1173 = vmatpush2.xpose.msra.mxu0 0.0
    %1174 = vmatprep.subr.mxu0 0.0
    %1175 = vmatpush2.xpose.msra.mxu0 0.0
    %1176 = vmatprep.subr.mxu0 0.0
    %1177 = vmatpush2.xpose.msra.mxu0 0.0
    %1178 = vmatprep.subr.mxu0 0.0
    %1179 = vmatpush2.xpose.msra.mxu0 0.0
    %1180 = vmatprep.subr.mxu0 0.0
    %1181 = vmatpush2.xpose.msra.mxu0 0.0
    %1182 = vmatprep.subr.mxu0 0.0
    %1183 = vmatpush2.xpose.msra.mxu0 0.0
    %1184 = vmatprep.subr.mxu0 0.0
    %1185 = vmatpush2.xpose.msra.mxu0 0.0
    %1186 = vmatprep.subr.mxu0 0.0
    %1187 = vmatpush2.xpose.msra.mxu0 0.0
    %1188 = vmatprep.subr.mxu0 0.0
    %1189 = vmatpush2.xpose.msra.mxu0 0.0
    %1190 = vmatprep.mubr.f32.mxu0 0.0
    %1191 = vmatmul.mubr.f32.gmra.mxu0 %v1122
    %v1192 = vpop.f32.mrf.mxu0
    %v1193 = vadd.f32 0.0, %v1192
    %v1194 = vpop.f32.mrf.mxu0
    %1195 = vdwg.mxu0
    %v1196 = vsel %vm159, %v1193, -inf
    %1197 = vmax.xlane.f32.xlu0 %v1196
    %v1198 = vpop.xlane.xlu0 %1197
    %v1199 = vsub.f32 %v1193, %v1198
    %v1200 = vmul.f32 %v1199, 1.442695
    %v1201 = vpow.pop %v1200
    %v1202 = vsel %vm159, %v1201, 0.0
    %1203 = vadd.xlane.f32.xlu0 %v1202
    %v1204 = vpop.xlane.xlu0 %1203
    %1205 = vrot.lane.b32.xlu0 %v145, 64
    %v1206 = vpop.permute.xlu0 %1205
    %v1209 = vsel %vm159, %v1201, 0
    %1211 = vmatprep.subr.mxu0 0.0
    %1212 = vmatpush1.msra.mxu0 0.0
    %1213 = vmatprep.subr.mxu0 0.0
    %1214 = vmatpush1.msra.mxu0 0.0
    %1215 = vmatprep.subr.mxu0 0.0
    %1216 = vmatpush1.msra.mxu0 0.0
    %1217 = vmatprep.subr.mxu0 0.0
    %1218 = vmatpush1.msra.mxu0 0.0
    %1219 = vmatprep.subr.mxu0 0.0
    %1220 = vmatpush1.msra.mxu0 0.0
    %1221 = vmatprep.subr.mxu0 0.0
    %1222 = vmatpush1.msra.mxu0 0.0
    %1223 = vmatprep.subr.mxu0 0.0
    %1224 = vmatpush1.msra.mxu0 0.0
    %1225 = vmatprep.subr.mxu0 0.0
    %1226 = vmatpush1.msra.mxu0 0.0
    %1227 = vmatprep.subr.mxu0 0.0
    %1228 = vmatpush1.msra.mxu0 0.0
    %1229 = vmatprep.subr.mxu0 0.0
    %1230 = vmatpush1.msra.mxu0 0.0
    %1231 = vmatprep.subr.mxu0 0.0
    %1232 = vmatpush1.msra.mxu0 0.0
    %1233 = vmatprep.subr.mxu0 0.0
    %1234 = vmatpush1.msra.mxu0 0.0
    %1235 = vmatprep.subr.mxu0 0.0
    %1236 = vmatpush1.msra.mxu0 0.0
    %1237 = vmatprep.subr.mxu0 0.0
    %1238 = vmatpush1.msra.mxu0 0.0
    %1239 = vmatprep.subr.mxu0 0.0
    %1240 = vmatpush1.msra.mxu0 0.0
    %1241 = vmatprep.subr.mxu0 0.0
    %1242 = vmatpush1.msra.mxu0 %v1206
    %1243 = vmatprep.subr.mxu0 0.0
    %1244 = vmatpush2.msra.mxu0 0.0
    %1245 = vmatprep.subr.mxu0 0.0
    %1246 = vmatpush2.msra.mxu0 0.0
    %1247 = vmatprep.subr.mxu0 0.0
    %1248 = vmatpush2.msra.mxu0 0.0
    %1249 = vmatprep.subr.mxu0 0.0
    %1250 = vmatpush2.msra.mxu0 0.0
    %1251 = vmatprep.subr.mxu0 0.0
    %1252 = vmatpush2.msra.mxu0 0.0
    %1253 = vmatprep.subr.mxu0 0.0
    %1254 = vmatpush2.msra.mxu0 0.0
    %1255 = vmatprep.subr.mxu0 0.0
    %1256 = vmatpush2.msra.mxu0 0.0
    %1257 = vmatprep.subr.mxu0 0.0
    %1258 = vmatpush2.msra.mxu0 0.0
    %1259 = vmatprep.subr.mxu0 0.0
    %1260 = vmatpush2.msra.mxu0 0.0
    %1261 = vmatprep.subr.mxu0 0.0
    %1262 = vmatpush2.msra.mxu0 0.0
    %1263 = vmatprep.subr.mxu0 0.0
    %1264 = vmatpush2.msra.mxu0 0.0
    %1265 = vmatprep.subr.mxu0 0.0
    %1266 = vmatpush2.msra.mxu0 0.0
    %1267 = vmatprep.subr.mxu0 0.0
    %1268 = vmatpush2.msra.mxu0 0.0
    %1269 = vmatprep.subr.mxu0 0.0
    %1270 = vmatpush2.msra.mxu0 0.0
    %1271 = vmatprep.subr.mxu0 0.0
    %1272 = vmatpush2.msra.mxu0 0.0
    %1273 = vmatprep.subr.mxu0 0.0
    %1274 = vmatpush2.msra.mxu0 0.0
    %1275 = vmatprep.mubr.f32.mxu0 0.0
    %1276 = vmatmul.mubr.f32.gmra.mxu0 %v1209
    %v1277 = vpop.f32.mrf.mxu0
    %v1278 = vadd.f32 0.0, %v1277
    %v1279 = vpop.f32.mrf.mxu0
    %1280 = vdwg.mxu0
    %v1281 = vrcp.pop %v1204
    %v1282 = vmul.f32 %v1278, %v1281
    %v1283 = vld [vmem:[#allocation7] sm:$0xff]
    %v1285 = vsel %vm159, %v1282, 0
    %1287 = vmatprep.subr.mxu0 0.0
    %1288 = vmatpush1.msra.mxu0 0.0
    %1289 = vmatprep.subr.mxu0 0.0
    %1290 = vmatpush1.msra.mxu0 0.0
    %1291 = vmatprep.subr.mxu0 0.0
    %1292 = vmatpush1.msra.mxu0 0.0
    %1293 = vmatprep.subr.mxu0 0.0
    %1294 = vmatpush1.msra.mxu0 0.0
    %1295 = vmatprep.subr.mxu0 0.0
    %1296 = vmatpush1.msra.mxu0 0.0
    %1297 = vmatprep.subr.mxu0 0.0
    %1298 = vmatpush1.msra.mxu0 0.0
    %1299 = vmatprep.subr.mxu0 0.0
    %1300 = vmatpush1.msra.mxu0 0.0
    %1301 = vmatprep.subr.mxu0 0.0
    %1302 = vmatpush1.msra.mxu0 0.0
    %1303 = vmatprep.subr.mxu0 0.0
    %1304 = vmatpush1.msra.mxu0 0.0
    %1305 = vmatprep.subr.mxu0 0.0
    %1306 = vmatpush1.msra.mxu0 0.0
    %1307 = vmatprep.subr.mxu0 0.0
    %1308 = vmatpush1.msra.mxu0 0.0
    %1309 = vmatprep.subr.mxu0 0.0
    %1310 = vmatpush1.msra.mxu0 0.0
    %1311 = vmatprep.subr.mxu0 0.0
    %1312 = vmatpush1.msra.mxu0 0.0
    %1313 = vmatprep.subr.mxu0 0.0
    %1314 = vmatpush1.msra.mxu0 0.0
    %1315 = vmatprep.subr.mxu0 0.0
    %1316 = vmatpush1.msra.mxu0 0.0
    %1317 = vmatprep.subr.mxu0 0.0
    %1318 = vmatpush1.msra.mxu0 %v1283
    %1319 = vmatprep.subr.mxu0 0.0
    %1320 = vmatpush2.msra.mxu0 0.0
    %1321 = vmatprep.subr.mxu0 0.0
    %1322 = vmatpush2.msra.mxu0 0.0
    %1323 = vmatprep.subr.mxu0 0.0
    %1324 = vmatpush2.msra.mxu0 0.0
    %1325 = vmatprep.subr.mxu0 0.0
    %1326 = vmatpush2.msra.mxu0 0.0
    %1327 = vmatprep.subr.mxu0 0.0
    %1328 = vmatpush2.msra.mxu0 0.0
    %1329 = vmatprep.subr.mxu0 0.0
    %1330 = vmatpush2.msra.mxu0 0.0
    %1331 = vmatprep.subr.mxu0 0.0
    %1332 = vmatpush2.msra.mxu0 0.0
    %1333 = vmatprep.subr.mxu0 0.0
    %1334 = vmatpush2.msra.mxu0 0.0
    %1335 = vmatprep.subr.mxu0 0.0
    %1336 = vmatpush2.msra.mxu0 0.0
    %1337 = vmatprep.subr.mxu0 0.0
    %1338 = vmatpush2.msra.mxu0 0.0
    %1339 = vmatprep.subr.mxu0 0.0
    %1340 = vmatpush2.msra.mxu0 0.0
    %1341 = vmatprep.subr.mxu0 0.0
    %1342 = vmatpush2.msra.mxu0 0.0
    %1343 = vmatprep.subr.mxu0 0.0
    %1344 = vmatpush2.msra.mxu0 0.0
    %1345 = vmatprep.subr.mxu0 0.0
    %1346 = vmatpush2.msra.mxu0 0.0
    %1347 = vmatprep.subr.mxu0 0.0
    %1348 = vmatpush2.msra.mxu0 0.0
    %1349 = vmatprep.subr.mxu0 0.0
    %1350 = vmatpush2.msra.mxu0 0.0
    %1351 = vmatprep.mubr.f32.mxu0 0.0
    %1352 = vmatmul.mubr.f32.gmra.mxu0 %v1285
    %v1353 = vpop.f32.mrf.mxu0
    %v1354 = vadd.f32 0.0, %v1353
    %v1355 = vpop.f32.mrf.mxu0
    %1356 = vdwg.mxu0
    %v1357 = vadd.f32 %v1118, %v1354
    %1358 = vrot.lane.b32.xlu0 %v145, 120
    %v1359 = vpop.permute.xlu0 %1358
    %1360 = vrot.lane.b32.xlu0 %v145, 88
    %v1361 = vpop.permute.xlu0 %1360
    %v1362 = vsel %vm159, %v1359, 0
    %v1364 = vsel %vm159, %v1361, 0
    %1366 = vmatprep.subr.mxu0 0.0
    %1367 = vmatpush1.xpose.msra.mxu0 0.0
    %1368 = vmatprep.subr.mxu0 0.0
    %1369 = vmatpush1.xpose.msra.mxu0 0.0
    %1370 = vmatprep.subr.mxu0 0.0
    %1371 = vmatpush1.xpose.msra.mxu0 0.0
    %1372 = vmatprep.subr.mxu0 0.0
    %1373 = vmatpush1.xpose.msra.mxu0 0.0
    %1374 = vmatprep.subr.mxu0 0.0
    %1375 = vmatpush1.xpose.msra.mxu0 0.0
    %1376 = vmatprep.subr.mxu0 0.0
    %1377 = vmatpush1.xpose.msra.mxu0 0.0
    %1378 = vmatprep.subr.mxu0 0.0
    %1379 = vmatpush1.xpose.msra.mxu0 0.0
    %1380 = vmatprep.subr.mxu0 0.0
    %1381 = vmatpush1.xpose.msra.mxu0 0.0
    %1382 = vmatprep.subr.mxu0 0.0
    %1383 = vmatpush1.xpose.msra.mxu0 0.0
    %1384 = vmatprep.subr.mxu0 0.0
    %1385 = vmatpush1.xpose.msra.mxu0 0.0
    %1386 = vmatprep.subr.mxu0 0.0
    %1387 = vmatpush1.xpose.msra.mxu0 0.0
    %1388 = vmatprep.subr.mxu0 0.0
    %1389 = vmatpush1.xpose.msra.mxu0 0.0
    %1390 = vmatprep.subr.mxu0 0.0
    %1391 = vmatpush1.xpose.msra.mxu0 0.0
    %1392 = vmatprep.subr.mxu0 0.0
    %1393 = vmatpush1.xpose.msra.mxu0 0.0
    %1394 = vmatprep.subr.mxu0 0.0
    %1395 = vmatpush1.xpose.msra.mxu0 0.0
    %1396 = vmatprep.subr.mxu0 0.0
    %1397 = vmatpush1.xpose.msra.mxu0 %v1364
    %1398 = vmatprep.subr.mxu0 0.0
    %1399 = vmatpush2.xpose.msra.mxu0 0.0
    %1400 = vmatprep.subr.mxu0 0.0
    %1401 = vmatpush2.xpose.msra.mxu0 0.0
    %1402 = vmatprep.subr.mxu0 0.0
    %1403 = vmatpush2.xpose.msra.mxu0 0.0
    %1404 = vmatprep.subr.mxu0 0.0
    %1405 = vmatpush2.xpose.msra.mxu0 0.0
    %1406 = vmatprep.subr.mxu0 0.0
    %1407 = vmatpush2.xpose.msra.mxu0 0.0
    %1408 = vmatprep.subr.mxu0 0.0
    %1409 = vmatpush2.xpose.msra.mxu0 0.0
    %1410 = vmatprep.subr.mxu0 0.0
    %1411 = vmatpush2.xpose.msra.mxu0 0.0
    %1412 = vmatprep.subr.mxu0 0.0
    %1413 = vmatpush2.xpose.msra.mxu0 0.0
    %1414 = vmatprep.subr.mxu0 0.0
    %1415 = vmatpush2.xpose.msra.mxu0 0.0
    %1416 = vmatprep.subr.mxu0 0.0
    %1417 = vmatpush2.xpose.msra.mxu0 0.0
    %1418 = vmatprep.subr.mxu0 0.0
    %1419 = vmatpush2.xpose.msra.mxu0 0.0
    %1420 = vmatprep.subr.mxu0 0.0
    %1421 = vmatpush2.xpose.msra.mxu0 0.0
    %1422 = vmatprep.subr.mxu0 0.0
    %1423 = vmatpush2.xpose.msra.mxu0 0.0
    %1424 = vmatprep.subr.mxu0 0.0
    %1425 = vmatpush2.xpose.msra.mxu0 0.0
    %1426 = vmatprep.subr.mxu0 0.0
    %1427 = vmatpush2.xpose.msra.mxu0 0.0
    %1428 = vmatprep.subr.mxu0 0.0
    %1429 = vmatpush2.xpose.msra.mxu0 0.0
    %1430 = vmatprep.mubr.f32.mxu0 0.0
    %1431 = vmatmul.mubr.f32.gmra.mxu0 %v1362
    %v1432 = vpop.f32.mrf.mxu0
    %v1433 = vadd.f32 0.0, %v1432
    %v1434 = vpop.f32.mrf.mxu0
    %1435 = vdwg.mxu0
    %v1436 = vsel %vm159, %v1433, -inf
    %1437 = vmax.xlane.f32.xlu0 %v1436
    %v1438 = vpop.xlane.xlu0 %1437
    %v1439 = vsub.f32 %v1433, %v1438
    %v1440 = vmul.f32 %v1439, 1.442695
    %v1441 = vpow.pop %v1440
    %v1442 = vsel %vm159, %v1441, 0.0
    %1443 = vadd.xlane.f32.xlu0 %v1442
    %v1444 = vpop.xlane.xlu0 %1443
    %1445 = vrot.lane.b32.xlu0 %v145, 56
    %v1446 = vpop.permute.xlu0 %1445
    %v1449 = vsel %vm159, %v1441, 0
    %1451 = vmatprep.subr.mxu0 0.0
    %1452 = vmatpush1.msra.mxu0 0.0
    %1453 = vmatprep.subr.mxu0 0.0
    %1454 = vmatpush1.msra.mxu0 0.0
    %1455 = vmatprep.subr.mxu0 0.0
    %1456 = vmatpush1.msra.mxu0 0.0
    %1457 = vmatprep.subr.mxu0 0.0
    %1458 = vmatpush1.msra.mxu0 0.0
    %1459 = vmatprep.subr.mxu0 0.0
    %1460 = vmatpush1.msra.mxu0 0.0
    %1461 = vmatprep.subr.mxu0 0.0
    %1462 = vmatpush1.msra.mxu0 0.0
    %1463 = vmatprep.subr.mxu0 0.0
    %1464 = vmatpush1.msra.mxu0 0.0
    %1465 = vmatprep.subr.mxu0 0.0
    %1466 = vmatpush1.msra.mxu0 0.0
    %1467 = vmatprep.subr.mxu0 0.0
    %1468 = vmatpush1.msra.mxu0 0.0
    %1469 = vmatprep.subr.mxu0 0.0
    %1470 = vmatpush1.msra.mxu0 0.0
    %1471 = vmatprep.subr.mxu0 0.0
    %1472 = vmatpush1.msra.mxu0 0.0
    %1473 = vmatprep.subr.mxu0 0.0
    %1474 = vmatpush1.msra.mxu0 0.0
    %1475 = vmatprep.subr.mxu0 0.0
    %1476 = vmatpush1.msra.mxu0 0.0
    %1477 = vmatprep.subr.mxu0 0.0
    %1478 = vmatpush1.msra.mxu0 0.0
    %1479 = vmatprep.subr.mxu0 0.0
    %1480 = vmatpush1.msra.mxu0 0.0
    %1481 = vmatprep.subr.mxu0 0.0
    %1482 = vmatpush1.msra.mxu0 %v1446
    %1483 = vmatprep.subr.mxu0 0.0
    %1484 = vmatpush2.msra.mxu0 0.0
    %1485 = vmatprep.subr.mxu0 0.0
    %1486 = vmatpush2.msra.mxu0 0.0
    %1487 = vmatprep.subr.mxu0 0.0
    %1488 = vmatpush2.msra.mxu0 0.0
    %1489 = vmatprep.subr.mxu0 0.0
    %1490 = vmatpush2.msra.mxu0 0.0
    %1491 = vmatprep.subr.mxu0 0.0
    %1492 = vmatpush2.msra.mxu0 0.0
    %1493 = vmatprep.subr.mxu0 0.0
    %1494 = vmatpush2.msra.mxu0 0.0
    %1495 = vmatprep.subr.mxu0 0.0
    %1496 = vmatpush2.msra.mxu0 0.0
    %1497 = vmatprep.subr.mxu0 0.0
    %1498 = vmatpush2.msra.mxu0 0.0
    %1499 = vmatprep.subr.mxu0 0.0
    %1500 = vmatpush2.msra.mxu0 0.0
    %1501 = vmatprep.subr.mxu0 0.0
    %1502 = vmatpush2.msra.mxu0 0.0
    %1503 = vmatprep.subr.mxu0 0.0
    %1504 = vmatpush2.msra.mxu0 0.0
    %1505 = vmatprep.subr.mxu0 0.0
    %1506 = vmatpush2.msra.mxu0 0.0
    %1507 = vmatprep.subr.mxu0 0.0
    %1508 = vmatpush2.msra.mxu0 0.0
    %1509 = vmatprep.subr.mxu0 0.0
    %1510 = vmatpush2.msra.mxu0 0.0
    %1511 = vmatprep.subr.mxu0 0.0
    %1512 = vmatpush2.msra.mxu0 0.0
    %1513 = vmatprep.subr.mxu0 0.0
    %1514 = vmatpush2.msra.mxu0 0.0
    %1515 = vmatprep.mubr.f32.mxu0 0.0
    %1516 = vmatmul.mubr.f32.gmra.mxu0 %v1449
    %v1517 = vpop.f32.mrf.mxu0
    %v1518 = vadd.f32 0.0, %v1517
    %v1519 = vpop.f32.mrf.mxu0
    %1520 = vdwg.mxu0
    %v1521 = vrcp.pop %v1444
    %v1522 = vmul.f32 %v1518, %v1521
    %v1523 = vld [vmem:[#allocation7 + $0x8] sm:$0xff]
    %v1525 = vsel %vm159, %v1522, 0
    %1527 = vmatprep.subr.mxu0 0.0
    %1528 = vmatpush1.msra.mxu0 0.0
    %1529 = vmatprep.subr.mxu0 0.0
    %1530 = vmatpush1.msra.mxu0 0.0
    %1531 = vmatprep.subr.mxu0 0.0
    %1532 = vmatpush1.msra.mxu0 0.0
    %1533 = vmatprep.subr.mxu0 0.0
    %1534 = vmatpush1.msra.mxu0 0.0
    %1535 = vmatprep.subr.mxu0 0.0
    %1536 = vmatpush1.msra.mxu0 0.0
    %1537 = vmatprep.subr.mxu0 0.0
    %1538 = vmatpush1.msra.mxu0 0.0
    %1539 = vmatprep.subr.mxu0 0.0
    %1540 = vmatpush1.msra.mxu0 0.0
    %1541 = vmatprep.subr.mxu0 0.0
    %1542 = vmatpush1.msra.mxu0 0.0
    %1543 = vmatprep.subr.mxu0 0.0
    %1544 = vmatpush1.msra.mxu0 0.0
    %1545 = vmatprep.subr.mxu0 0.0
    %1546 = vmatpush1.msra.mxu0 0.0
    %1547 = vmatprep.subr.mxu0 0.0
    %1548 = vmatpush1.msra.mxu0 0.0
    %1549 = vmatprep.subr.mxu0 0.0
    %1550 = vmatpush1.msra.mxu0 0.0
    %1551 = vmatprep.subr.mxu0 0.0
    %1552 = vmatpush1.msra.mxu0 0.0
    %1553 = vmatprep.subr.mxu0 0.0
    %1554 = vmatpush1.msra.mxu0 0.0
    %1555 = vmatprep.subr.mxu0 0.0
    %1556 = vmatpush1.msra.mxu0 0.0
    %1557 = vmatprep.subr.mxu0 0.0
    %1558 = vmatpush1.msra.mxu0 %v1523
    %1559 = vmatprep.subr.mxu0 0.0
    %1560 = vmatpush2.msra.mxu0 0.0
    %1561 = vmatprep.subr.mxu0 0.0
    %1562 = vmatpush2.msra.mxu0 0.0
    %1563 = vmatprep.subr.mxu0 0.0
    %1564 = vmatpush2.msra.mxu0 0.0
    %1565 = vmatprep.subr.mxu0 0.0
    %1566 = vmatpush2.msra.mxu0 0.0
    %1567 = vmatprep.subr.mxu0 0.0
    %1568 = vmatpush2.msra.mxu0 0.0
    %1569 = vmatprep.subr.mxu0 0.0
    %1570 = vmatpush2.msra.mxu0 0.0
    %1571 = vmatprep.subr.mxu0 0.0
    %1572 = vmatpush2.msra.mxu0 0.0
    %1573 = vmatprep.subr.mxu0 0.0
    %1574 = vmatpush2.msra.mxu0 0.0
    %1575 = vmatprep.subr.mxu0 0.0
    %1576 = vmatpush2.msra.mxu0 0.0
    %1577 = vmatprep.subr.mxu0 0.0
    %1578 = vmatpush2.msra.mxu0 0.0
    %1579 = vmatprep.subr.mxu0 0.0
    %1580 = vmatpush2.msra.mxu0 0.0
    %1581 = vmatprep.subr.mxu0 0.0
    %1582 = vmatpush2.msra.mxu0 0.0
    %1583 = vmatprep.subr.mxu0 0.0
    %1584 = vmatpush2.msra.mxu0 0.0
    %1585 = vmatprep.subr.mxu0 0.0
    %1586 = vmatpush2.msra.mxu0 0.0
    %1587 = vmatprep.subr.mxu0 0.0
    %1588 = vmatpush2.msra.mxu0 0.0
    %1589 = vmatprep.subr.mxu0 0.0
    %1590 = vmatpush2.msra.mxu0 0.0
    %1591 = vmatprep.mubr.f32.mxu0 0.0
    %1592 = vmatmul.mubr.f32.gmra.mxu0 %v1525
    %v1593 = vpop.f32.mrf.mxu0
    %v1594 = vadd.f32 0.0, %v1593
    %v1595 = vpop.f32.mrf.mxu0
    %1596 = vdwg.mxu0
    %v1597 = vadd.f32 %v1357, %v1594
    %1598 = vrot.lane.b32.xlu0 %v145, 112
    %v1599 = vpop.permute.xlu0 %1598
    %1600 = vrot.lane.b32.xlu0 %v145, 80
    %v1601 = vpop.permute.xlu0 %1600
    %v1602 = vsel %vm159, %v1599, 0
    %v1604 = vsel %vm159, %v1601, 0
    %1606 = vmatprep.subr.mxu0 0.0
    %1607 = vmatpush1.xpose.msra.mxu0 0.0
    %1608 = vmatprep.subr.mxu0 0.0
    %1609 = vmatpush1.xpose.msra.mxu0 0.0
    %1610 = vmatprep.subr.mxu0 0.0
    %1611 = vmatpush1.xpose.msra.mxu0 0.0
    %1612 = vmatprep.subr.mxu0 0.0
    %1613 = vmatpush1.xpose.msra.mxu0 0.0
    %1614 = vmatprep.subr.mxu0 0.0
    %1615 = vmatpush1.xpose.msra.mxu0 0.0
    %1616 = vmatprep.subr.mxu0 0.0
    %1617 = vmatpush1.xpose.msra.mxu0 0.0
    %1618 = vmatprep.subr.mxu0 0.0
    %1619 = vmatpush1.xpose.msra.mxu0 0.0
    %1620 = vmatprep.subr.mxu0 0.0
    %1621 = vmatpush1.xpose.msra.mxu0 0.0
    %1622 = vmatprep.subr.mxu0 0.0
    %1623 = vmatpush1.xpose.msra.mxu0 0.0
    %1624 = vmatprep.subr.mxu0 0.0
    %1625 = vmatpush1.xpose.msra.mxu0 0.0
    %1626 = vmatprep.subr.mxu0 0.0
    %1627 = vmatpush1.xpose.msra.mxu0 0.0
    %1628 = vmatprep.subr.mxu0 0.0
    %1629 = vmatpush1.xpose.msra.mxu0 0.0
    %1630 = vmatprep.subr.mxu0 0.0
    %1631 = vmatpush1.xpose.msra.mxu0 0.0
    %1632 = vmatprep.subr.mxu0 0.0
    %1633 = vmatpush1.xpose.msra.mxu0 0.0
    %1634 = vmatprep.subr.mxu0 0.0
    %1635 = vmatpush1.xpose.msra.mxu0 0.0
    %1636 = vmatprep.subr.mxu0 0.0
    %1637 = vmatpush1.xpose.msra.mxu0 %v1604
    %1638 = vmatprep.subr.mxu0 0.0
    %1639 = vmatpush2.xpose.msra.mxu0 0.0
    %1640 = vmatprep.subr.mxu0 0.0
    %1641 = vmatpush2.xpose.msra.mxu0 0.0
    %1642 = vmatprep.subr.mxu0 0.0
    %1643 = vmatpush2.xpose.msra.mxu0 0.0
    %1644 = vmatprep.subr.mxu0 0.0
    %1645 = vmatpush2.xpose.msra.mxu0 0.0
    %1646 = vmatprep.subr.mxu0 0.0
    %1647 = vmatpush2.xpose.msra.mxu0 0.0
    %1648 = vmatprep.subr.mxu0 0.0
    %1649 = vmatpush2.xpose.msra.mxu0 0.0
    %1650 = vmatprep.subr.mxu0 0.0
    %1651 = vmatpush2.xpose.msra.mxu0 0.0
    %1652 = vmatprep.subr.mxu0 0.0
    %1653 = vmatpush2.xpose.msra.mxu0 0.0
    %1654 = vmatprep.subr.mxu0 0.0
    %1655 = vmatpush2.xpose.msra.mxu0 0.0
    %1656 = vmatprep.subr.mxu0 0.0
    %1657 = vmatpush2.xpose.msra.mxu0 0.0
    %1658 = vmatprep.subr.mxu0 0.0
    %1659 = vmatpush2.xpose.msra.mxu0 0.0
    %1660 = vmatprep.subr.mxu0 0.0
    %1661 = vmatpush2.xpose.msra.mxu0 0.0
    %1662 = vmatprep.subr.mxu0 0.0
    %1663 = vmatpush2.xpose.msra.mxu0 0.0
    %1664 = vmatprep.subr.mxu0 0.0
    %1665 = vmatpush2.xpose.msra.mxu0 0.0
    %1666 = vmatprep.subr.mxu0 0.0
    %1667 = vmatpush2.xpose.msra.mxu0 0.0
    %1668 = vmatprep.subr.mxu0 0.0
    %1669 = vmatpush2.xpose.msra.mxu0 0.0
    %1670 = vmatprep.mubr.f32.mxu0 0.0
    %1671 = vmatmul.mubr.f32.gmra.mxu0 %v1602
    %v1672 = vpop.f32.mrf.mxu0
    %v1673 = vadd.f32 0.0, %v1672
    %v1674 = vpop.f32.mrf.mxu0
    %1675 = vdwg.mxu0
    %v1676 = vsel %vm159, %v1673, -inf
    %1677 = vmax.xlane.f32.xlu0 %v1676
    %v1678 = vpop.xlane.xlu0 %1677
    %v1679 = vsub.f32 %v1673, %v1678
    %v1680 = vmul.f32 %v1679, 1.442695
    %v1681 = vpow.pop %v1680
    %v1682 = vsel %vm159, %v1681, 0.0
    %1683 = vadd.xlane.f32.xlu0 %v1682
    %v1684 = vpop.xlane.xlu0 %1683
    %1685 = vrot.lane.b32.xlu0 %v145, 48
    %v1686 = vpop.permute.xlu0 %1685
    %v1689 = vsel %vm159, %v1681, 0
    %1691 = vmatprep.subr.mxu0 0.0
    %1692 = vmatpush1.msra.mxu0 0.0
    %1693 = vmatprep.subr.mxu0 0.0
    %1694 = vmatpush1.msra.mxu0 0.0
    %1695 = vmatprep.subr.mxu0 0.0
    %1696 = vmatpush1.msra.mxu0 0.0
    %1697 = vmatprep.subr.mxu0 0.0
    %1698 = vmatpush1.msra.mxu0 0.0
    %1699 = vmatprep.subr.mxu0 0.0
    %1700 = vmatpush1.msra.mxu0 0.0
    %1701 = vmatprep.subr.mxu0 0.0
    %1702 = vmatpush1.msra.mxu0 0.0
    %1703 = vmatprep.subr.mxu0 0.0
    %1704 = vmatpush1.msra.mxu0 0.0
    %1705 = vmatprep.subr.mxu0 0.0
    %1706 = vmatpush1.msra.mxu0 0.0
    %1707 = vmatprep.subr.mxu0 0.0
    %1708 = vmatpush1.msra.mxu0 0.0
    %1709 = vmatprep.subr.mxu0 0.0
    %1710 = vmatpush1.msra.mxu0 0.0
    %1711 = vmatprep.subr.mxu0 0.0
    %1712 = vmatpush1.msra.mxu0 0.0
    %1713 = vmatprep.subr.mxu0 0.0
    %1714 = vmatpush1.msra.mxu0 0.0
    %1715 = vmatprep.subr.mxu0 0.0
    %1716 = vmatpush1.msra.mxu0 0.0
    %1717 = vmatprep.subr.mxu0 0.0
    %1718 = vmatpush1.msra.mxu0 0.0
    %1719 = vmatprep.subr.mxu0 0.0
    %1720 = vmatpush1.msra.mxu0 0.0
    %1721 = vmatprep.subr.mxu0 0.0
    %1722 = vmatpush1.msra.mxu0 %v1686
    %1723 = vmatprep.subr.mxu0 0.0
    %1724 = vmatpush2.msra.mxu0 0.0
    %1725 = vmatprep.subr.mxu0 0.0
    %1726 = vmatpush2.msra.mxu0 0.0
    %1727 = vmatprep.subr.mxu0 0.0
    %1728 = vmatpush2.msra.mxu0 0.0
    %1729 = vmatprep.subr.mxu0 0.0
    %1730 = vmatpush2.msra.mxu0 0.0
    %1731 = vmatprep.subr.mxu0 0.0
    %1732 = vmatpush2.msra.mxu0 0.0
    %1733 = vmatprep.subr.mxu0 0.0
    %1734 = vmatpush2.msra.mxu0 0.0
    %1735 = vmatprep.subr.mxu0 0.0
    %1736 = vmatpush2.msra.mxu0 0.0
    %1737 = vmatprep.subr.mxu0 0.0
    %1738 = vmatpush2.msra.mxu0 0.0
    %1739 = vmatprep.subr.mxu0 0.0
    %1740 = vmatpush2.msra.mxu0 0.0
    %1741 = vmatprep.subr.mxu0 0.0
    %1742 = vmatpush2.msra.mxu0 0.0
    %1743 = vmatprep.subr.mxu0 0.0
    %1744 = vmatpush2.msra.mxu0 0.0
    %1745 = vmatprep.subr.mxu0 0.0
    %1746 = vmatpush2.msra.mxu0 0.0
    %1747 = vmatprep.subr.mxu0 0.0
    %1748 = vmatpush2.msra.mxu0 0.0
    %1749 = vmatprep.subr.mxu0 0.0
    %1750 = vmatpush2.msra.mxu0 0.0
    %1751 = vmatprep.subr.mxu0 0.0
    %1752 = vmatpush2.msra.mxu0 0.0
    %1753 = vmatprep.subr.mxu0 0.0
    %1754 = vmatpush2.msra.mxu0 0.0
    %1755 = vmatprep.mubr.f32.mxu0 0.0
    %1756 = vmatmul.mubr.f32.gmra.mxu0 %v1689
    %v1757 = vpop.f32.mrf.mxu0
    %v1758 = vadd.f32 0.0, %v1757
    %v1759 = vpop.f32.mrf.mxu0
    %1760 = vdwg.mxu0
    %v1761 = vrcp.pop %v1684
    %v1762 = vmul.f32 %v1758, %v1761
    %v1763 = vld [vmem:[#allocation7 + $0x10] sm:$0xff]
    %v1765 = vsel %vm159, %v1762, 0
    %1767 = vmatprep.subr.mxu0 0.0
    %1768 = vmatpush1.msra.mxu0 0.0
    %1769 = vmatprep.subr.mxu0 0.0
    %1770 = vmatpush1.msra.mxu0 0.0
    %1771 = vmatprep.subr.mxu0 0.0
    %1772 = vmatpush1.msra.mxu0 0.0
    %1773 = vmatprep.subr.mxu0 0.0
    %1774 = vmatpush1.msra.mxu0 0.0
    %1775 = vmatprep.subr.mxu0 0.0
    %1776 = vmatpush1.msra.mxu0 0.0
    %1777 = vmatprep.subr.mxu0 0.0
    %1778 = vmatpush1.msra.mxu0 0.0
    %1779 = vmatprep.subr.mxu0 0.0
    %1780 = vmatpush1.msra.mxu0 0.0
    %1781 = vmatprep.subr.mxu0 0.0
    %1782 = vmatpush1.msra.mxu0 0.0
    %1783 = vmatprep.subr.mxu0 0.0
    %1784 = vmatpush1.msra.mxu0 0.0
    %1785 = vmatprep.subr.mxu0 0.0
    %1786 = vmatpush1.msra.mxu0 0.0
    %1787 = vmatprep.subr.mxu0 0.0
    %1788 = vmatpush1.msra.mxu0 0.0
    %1789 = vmatprep.subr.mxu0 0.0
    %1790 = vmatpush1.msra.mxu0 0.0
    %1791 = vmatprep.subr.mxu0 0.0
    %1792 = vmatpush1.msra.mxu0 0.0
    %1793 = vmatprep.subr.mxu0 0.0
    %1794 = vmatpush1.msra.mxu0 0.0
    %1795 = vmatprep.subr.mxu0 0.0
    %1796 = vmatpush1.msra.mxu0 0.0
    %1797 = vmatprep.subr.mxu0 0.0
    %1798 = vmatpush1.msra.mxu0 %v1763
    %1799 = vmatprep.subr.mxu0 0.0
    %1800 = vmatpush2.msra.mxu0 0.0
    %1801 = vmatprep.subr.mxu0 0.0
    %1802 = vmatpush2.msra.mxu0 0.0
    %1803 = vmatprep.subr.mxu0 0.0
    %1804 = vmatpush2.msra.mxu0 0.0
    %1805 = vmatprep.subr.mxu0 0.0
    %1806 = vmatpush2.msra.mxu0 0.0
    %1807 = vmatprep.subr.mxu0 0.0
    %1808 = vmatpush2.msra.mxu0 0.0
    %1809 = vmatprep.subr.mxu0 0.0
    %1810 = vmatpush2.msra.mxu0 0.0
    %1811 = vmatprep.subr.mxu0 0.0
    %1812 = vmatpush2.msra.mxu0 0.0
    %1813 = vmatprep.subr.mxu0 0.0
    %1814 = vmatpush2.msra.mxu0 0.0
    %1815 = vmatprep.subr.mxu0 0.0
    %1816 = vmatpush2.msra.mxu0 0.0
    %1817 = vmatprep.subr.mxu0 0.0
    %1818 = vmatpush2.msra.mxu0 0.0
    %1819 = vmatprep.subr.mxu0 0.0
    %1820 = vmatpush2.msra.mxu0 0.0
    %1821 = vmatprep.subr.mxu0 0.0
    %1822 = vmatpush2.msra.mxu0 0.0
    %1823 = vmatprep.subr.mxu0 0.0
    %1824 = vmatpush2.msra.mxu0 0.0
    %1825 = vmatprep.subr.mxu0 0.0
    %1826 = vmatpush2.msra.mxu0 0.0
    %1827 = vmatprep.subr.mxu0 0.0
    %1828 = vmatpush2.msra.mxu0 0.0
    %1829 = vmatprep.subr.mxu0 0.0
    %1830 = vmatpush2.msra.mxu0 0.0
    %1831 = vmatprep.mubr.f32.mxu0 0.0
    %1832 = vmatmul.mubr.f32.gmra.mxu0 %v1765
    %v1833 = vpop.f32.mrf.mxu0
    %v1834 = vadd.f32 0.0, %v1833
    %v1835 = vpop.f32.mrf.mxu0
    %1836 = vdwg.mxu0
    %v1837 = vadd.f32 %v1597, %v1834
    %1838 = vrot.lane.b32.xlu0 %v145, 104
    %v1839 = vpop.permute.xlu0 %1838
    %1840 = vrot.lane.b32.xlu0 %v145, 72
    %v1841 = vpop.permute.xlu0 %1840
    %v1842 = vsel %vm159, %v1839, 0
    %v1844 = vsel %vm159, %v1841, 0
    %1846 = vmatprep.subr.mxu0 0.0
    %1847 = vmatpush1.xpose.msra.mxu0 0.0
    %1848 = vmatprep.subr.mxu0 0.0
    %1849 = vmatpush1.xpose.msra.mxu0 0.0
    %1850 = vmatprep.subr.mxu0 0.0
    %1851 = vmatpush1.xpose.msra.mxu0 0.0
    %1852 = vmatprep.subr.mxu0 0.0
    %1853 = vmatpush1.xpose.msra.mxu0 0.0
    %1854 = vmatprep.subr.mxu0 0.0
    %1855 = vmatpush1.xpose.msra.mxu0 0.0
    %1856 = vmatprep.subr.mxu0 0.0
    %1857 = vmatpush1.xpose.msra.mxu0 0.0
    %1858 = vmatprep.subr.mxu0 0.0
    %1859 = vmatpush1.xpose.msra.mxu0 0.0
    %1860 = vmatprep.subr.mxu0 0.0
    %1861 = vmatpush1.xpose.msra.mxu0 0.0
    %1862 = vmatprep.subr.mxu0 0.0
    %1863 = vmatpush1.xpose.msra.mxu0 0.0
    %1864 = vmatprep.subr.mxu0 0.0
    %1865 = vmatpush1.xpose.msra.mxu0 0.0
    %1866 = vmatprep.subr.mxu0 0.0
    %1867 = vmatpush1.xpose.msra.mxu0 0.0
    %1868 = vmatprep.subr.mxu0 0.0
    %1869 = vmatpush1.xpose.msra.mxu0 0.0
    %1870 = vmatprep.subr.mxu0 0.0
    %1871 = vmatpush1.xpose.msra.mxu0 0.0
    %1872 = vmatprep.subr.mxu0 0.0
    %1873 = vmatpush1.xpose.msra.mxu0 0.0
    %1874 = vmatprep.subr.mxu0 0.0
    %1875 = vmatpush1.xpose.msra.mxu0 0.0
    %1876 = vmatprep.subr.mxu0 0.0
    %1877 = vmatpush1.xpose.msra.mxu0 %v1844
    %1878 = vmatprep.subr.mxu0 0.0
    %1879 = vmatpush2.xpose.msra.mxu0 0.0
    %1880 = vmatprep.subr.mxu0 0.0
    %1881 = vmatpush2.xpose.msra.mxu0 0.0
    %1882 = vmatprep.subr.mxu0 0.0
    %1883 = vmatpush2.xpose.msra.mxu0 0.0
    %1884 = vmatprep.subr.mxu0 0.0
    %1885 = vmatpush2.xpose.msra.mxu0 0.0
    %1886 = vmatprep.subr.mxu0 0.0
    %1887 = vmatpush2.xpose.msra.mxu0 0.0
    %1888 = vmatprep.subr.mxu0 0.0
    %1889 = vmatpush2.xpose.msra.mxu0 0.0
    %1890 = vmatprep.subr.mxu0 0.0
    %1891 = vmatpush2.xpose.msra.mxu0 0.0
    %1892 = vmatprep.subr.mxu0 0.0
    %1893 = vmatpush2.xpose.msra.mxu0 0.0
    %1894 = vmatprep.subr.mxu0 0.0
    %1895 = vmatpush2.xpose.msra.mxu0 0.0
    %1896 = vmatprep.subr.mxu0 0.0
    %1897 = vmatpush2.xpose.msra.mxu0 0.0
    %1898 = vmatprep.subr.mxu0 0.0
    %1899 = vmatpush2.xpose.msra.mxu0 0.0
    %1900 = vmatprep.subr.mxu0 0.0
    %1901 = vmatpush2.xpose.msra.mxu0 0.0
    %1902 = vmatprep.subr.mxu0 0.0
    %1903 = vmatpush2.xpose.msra.mxu0 0.0
    %1904 = vmatprep.subr.mxu0 0.0
    %1905 = vmatpush2.xpose.msra.mxu0 0.0
    %1906 = vmatprep.subr.mxu0 0.0
    %1907 = vmatpush2.xpose.msra.mxu0 0.0
    %1908 = vmatprep.subr.mxu0 0.0
    %1909 = vmatpush2.xpose.msra.mxu0 0.0
    %1910 = vmatprep.mubr.f32.mxu0 0.0
    %1911 = vmatmul.mubr.f32.gmra.mxu0 %v1842
    %v1912 = vpop.f32.mrf.mxu0
    %v1913 = vadd.f32 0.0, %v1912
    %v1914 = vpop.f32.mrf.mxu0
    %1915 = vdwg.mxu0
    %v1916 = vsel %vm159, %v1913, -inf
    %1917 = vmax.xlane.f32.xlu0 %v1916
    %v1918 = vpop.xlane.xlu0 %1917
    %v1919 = vsub.f32 %v1913, %v1918
    %v1920 = vmul.f32 %v1919, 1.442695
    %v1921 = vpow.pop %v1920
    %v1922 = vsel %vm159, %v1921, 0.0
    %1923 = vadd.xlane.f32.xlu0 %v1922
    %v1924 = vpop.xlane.xlu0 %1923
    %1925 = vrot.lane.b32.xlu0 %v145, 40
    %v1926 = vpop.permute.xlu0 %1925
    %v1929 = vsel %vm159, %v1921, 0
    %1931 = vmatprep.subr.mxu0 0.0
    %1932 = vmatpush1.msra.mxu0 0.0
    %1933 = vmatprep.subr.mxu0 0.0
    %1934 = vmatpush1.msra.mxu0 0.0
    %1935 = vmatprep.subr.mxu0 0.0
    %1936 = vmatpush1.msra.mxu0 0.0
    %1937 = vmatprep.subr.mxu0 0.0
    %1938 = vmatpush1.msra.mxu0 0.0
    %1939 = vmatprep.subr.mxu0 0.0
    %1940 = vmatpush1.msra.mxu0 0.0
    %1941 = vmatprep.subr.mxu0 0.0
    %1942 = vmatpush1.msra.mxu0 0.0
    %1943 = vmatprep.subr.mxu0 0.0
    %1944 = vmatpush1.msra.mxu0 0.0
    %1945 = vmatprep.subr.mxu0 0.0
    %1946 = vmatpush1.msra.mxu0 0.0
    %1947 = vmatprep.subr.mxu0 0.0
    %1948 = vmatpush1.msra.mxu0 0.0
    %1949 = vmatprep.subr.mxu0 0.0
    %1950 = vmatpush1.msra.mxu0 0.0
    %1951 = vmatprep.subr.mxu0 0.0
    %1952 = vmatpush1.msra.mxu0 0.0
    %1953 = vmatprep.subr.mxu0 0.0
    %1954 = vmatpush1.msra.mxu0 0.0
    %1955 = vmatprep.subr.mxu0 0.0
    %1956 = vmatpush1.msra.mxu0 0.0
    %1957 = vmatprep.subr.mxu0 0.0
    %1958 = vmatpush1.msra.mxu0 0.0
    %1959 = vmatprep.subr.mxu0 0.0
    %1960 = vmatpush1.msra.mxu0 0.0
    %1961 = vmatprep.subr.mxu0 0.0
    %1962 = vmatpush1.msra.mxu0 %v1926
    %1963 = vmatprep.subr.mxu0 0.0
    %1964 = vmatpush2.msra.mxu0 0.0
    %1965 = vmatprep.subr.mxu0 0.0
    %1966 = vmatpush2.msra.mxu0 0.0
    %1967 = vmatprep.subr.mxu0 0.0
    %1968 = vmatpush2.msra.mxu0 0.0
    %1969 = vmatprep.subr.mxu0 0.0
    %1970 = vmatpush2.msra.mxu0 0.0
    %1971 = vmatprep.subr.mxu0 0.0
    %1972 = vmatpush2.msra.mxu0 0.0
    %1973 = vmatprep.subr.mxu0 0.0
    %1974 = vmatpush2.msra.mxu0 0.0
    %1975 = vmatprep.subr.mxu0 0.0
    %1976 = vmatpush2.msra.mxu0 0.0
    %1977 = vmatprep.subr.mxu0 0.0
    %1978 = vmatpush2.msra.mxu0 0.0
    %1979 = vmatprep.subr.mxu0 0.0
    %1980 = vmatpush2.msra.mxu0 0.0
    %1981 = vmatprep.subr.mxu0 0.0
    %1982 = vmatpush2.msra.mxu0 0.0
    %1983 = vmatprep.subr.mxu0 0.0
    %1984 = vmatpush2.msra.mxu0 0.0
    %1985 = vmatprep.subr.mxu0 0.0
    %1986 = vmatpush2.msra.mxu0 0.0
    %1987 = vmatprep.subr.mxu0 0.0
    %1988 = vmatpush2.msra.mxu0 0.0
    %1989 = vmatprep.subr.mxu0 0.0
    %1990 = vmatpush2.msra.mxu0 0.0
    %1991 = vmatprep.subr.mxu0 0.0
    %1992 = vmatpush2.msra.mxu0 0.0
    %1993 = vmatprep.subr.mxu0 0.0
    %1994 = vmatpush2.msra.mxu0 0.0
    %1995 = vmatprep.mubr.f32.mxu0 0.0
    %1996 = vmatmul.mubr.f32.gmra.mxu0 %v1929
    %v1997 = vpop.f32.mrf.mxu0
    %v1998 = vadd.f32 0.0, %v1997
    %v1999 = vpop.f32.mrf.mxu0
    %2000 = vdwg.mxu0
    %v2001 = vrcp.pop %v1924
    %v2002 = vmul.f32 %v1998, %v2001
    %v2003 = vld [vmem:[#allocation7 + $0x18] sm:$0xff]
    %v2005 = vsel %vm159, %v2002, 0
    %2007 = vmatprep.subr.mxu0 0.0
    %2008 = vmatpush1.msra.mxu0 0.0
    %2009 = vmatprep.subr.mxu0 0.0
    %2010 = vmatpush1.msra.mxu0 0.0
    %2011 = vmatprep.subr.mxu0 0.0
    %2012 = vmatpush1.msra.mxu0 0.0
    %2013 = vmatprep.subr.mxu0 0.0
    %2014 = vmatpush1.msra.mxu0 0.0
    %2015 = vmatprep.subr.mxu0 0.0
    %2016 = vmatpush1.msra.mxu0 0.0
    %2017 = vmatprep.subr.mxu0 0.0
    %2018 = vmatpush1.msra.mxu0 0.0
    %2019 = vmatprep.subr.mxu0 0.0
    %2020 = vmatpush1.msra.mxu0 0.0
    %2021 = vmatprep.subr.mxu0 0.0
    %2022 = vmatpush1.msra.mxu0 0.0
    %2023 = vmatprep.subr.mxu0 0.0
    %2024 = vmatpush1.msra.mxu0 0.0
    %2025 = vmatprep.subr.mxu0 0.0
    %2026 = vmatpush1.msra.mxu0 0.0
    %2027 = vmatprep.subr.mxu0 0.0
    %2028 = vmatpush1.msra.mxu0 0.0
    %2029 = vmatprep.subr.mxu0 0.0
    %2030 = vmatpush1.msra.mxu0 0.0
    %2031 = vmatprep.subr.mxu0 0.0
    %2032 = vmatpush1.msra.mxu0 0.0
    %2033 = vmatprep.subr.mxu0 0.0
    %2034 = vmatpush1.msra.mxu0 0.0
    %2035 = vmatprep.subr.mxu0 0.0
    %2036 = vmatpush1.msra.mxu0 0.0
    %2037 = vmatprep.subr.mxu0 0.0
    %2038 = vmatpush1.msra.mxu0 %v2003
    %2039 = vmatprep.subr.mxu0 0.0
    %2040 = vmatpush2.msra.mxu0 0.0
    %2041 = vmatprep.subr.mxu0 0.0
    %2042 = vmatpush2.msra.mxu0 0.0
    %2043 = vmatprep.subr.mxu0 0.0
    %2044 = vmatpush2.msra.mxu0 0.0
    %2045 = vmatprep.subr.mxu0 0.0
    %2046 = vmatpush2.msra.mxu0 0.0
    %2047 = vmatprep.subr.mxu0 0.0
    %2048 = vmatpush2.msra.mxu0 0.0
    %2049 = vmatprep.subr.mxu0 0.0
    %2050 = vmatpush2.msra.mxu0 0.0
    %2051 = vmatprep.subr.mxu0 0.0
    %2052 = vmatpush2.msra.mxu0 0.0
    %2053 = vmatprep.subr.mxu0 0.0
    %2054 = vmatpush2.msra.mxu0 0.0
    %2055 = vmatprep.subr.mxu0 0.0
    %2056 = vmatpush2.msra.mxu0 0.0
    %2057 = vmatprep.subr.mxu0 0.0
    %2058 = vmatpush2.msra.mxu0 0.0
    %2059 = vmatprep.subr.mxu0 0.0
    %2060 = vmatpush2.msra.mxu0 0.0
    %2061 = vmatprep.subr.mxu0 0.0
    %2062 = vmatpush2.msra.mxu0 0.0
    %2063 = vmatprep.subr.mxu0 0.0
    %2064 = vmatpush2.msra.mxu0 0.0
    %2065 = vmatprep.subr.mxu0 0.0
    %2066 = vmatpush2.msra.mxu0 0.0
    %2067 = vmatprep.subr.mxu0 0.0
    %2068 = vmatpush2.msra.mxu0 0.0
    %2069 = vmatprep.subr.mxu0 0.0
    %2070 = vmatpush2.msra.mxu0 0.0
    %2071 = vmatprep.mubr.f32.mxu0 0.0
    %2072 = vmatmul.mubr.f32.gmra.mxu0 %v2005
    %v2073 = vpop.f32.mrf.mxu0
    %v2074 = vadd.f32 0.0, %v2073
    %v2075 = vpop.f32.mrf.mxu0
    %2076 = vdwg.mxu0
    %v2077 = vadd.f32 %v1837, %v2074
    %s2078 = scalar_lea.vmem [#allocation8], 8
    %2079 = vst.msk [vmem:[%s2078] sm:$0xff] %vm66, %v2077
    // Predicated region
    $region30: #{tpu_custom_call.1} parent=1 // pred_check
      _
    $region31: #{tpu_custom_call.1} parent=1 // pred_check_branch
      %2081 = sbr.rel (0) target = $region33
    $region32: #{tpu_custom_call.1} parent=1 // pred_region
      %s2083 = ssub.s32 256, 256
      %2084 = vsyncadd [#allocation4], %s2083
      %s2085 = sshll.u32 [#allocation8], 4
      %s2086 = int_to_ptr.vmem [resolvable:$true] %s2085
      %2091 = dma.vmem_to_hbm [thread:$0]  %s2086, 256, %s4, [#allocation4], 128, 128, 8
    $region33: #{tpu_custom_call.1} parent=1 // pred_fallthru
      _
    // Predicated region
    $region34: #{tpu_custom_call.1} parent=1 // pred_check
      _
    $region35: #{tpu_custom_call.1} parent=1 // pred_check_branch
      %2093 = sbr.rel (0) target = $region37
    $region36: #{tpu_custom_call.1} parent=1 // pred_region
      %2094 = dma.done [#allocation4], 256
    $region37: #{tpu_custom_call.1} parent=1 // pred_fallthru
      _
    %2095 = vsyncpa [#allocation3], 1
    %2096 = vsyncpa [#allocation6], 1
    %2097 = vsyncpa [#allocation4], 1

</llo_original>
